<compile_context>
chip_gen: v5e
topology: v5e:2x2
jax: 0.10.0
libtpu: 0.0.40
codegen_flags: <defaults>
</compile_context>

<pallas_src>
import functools

import jax
import jax.numpy as jnp
from jax.experimental import pallas as pl
from jax.experimental.pallas import tpu as pltpu


# ----------------------------------------------------------------------------
# Constants
# ----------------------------------------------------------------------------
ATOM_DIMS = 6
SURF_DIMS = 10
ATOM_LINEAR_DIMS = [ATOM_DIMS, 16, 16]      # params.atom.linear = [16, 16]
SURF_HEAD_MLP = [32, 32]                    # params.surf.head.mlp
SURF_RADIUS = 0.6                           # params.surf.radius
SURF_IN = SURF_DIMS + ATOM_LINEAR_DIMS[-1]  # 10 + 16 = 26
HEAD_MLP = [SURF_IN] + SURF_HEAD_MLP        # [26, 32, 32]

TQ = 256          # query-point tile (lanes of all channel-first tensors)
TK = 256          # neighbour-point tile (streamed over the "arbitrary" grid axis)
AUG = 5           # augmented coordinate features: [x, y, z, |p|^2, 1]
_FAR = 1.0e6      # padding coordinate: far outside every real radius ball
_VMEM_LIMIT = 32 * 1024 * 1024


def _round_up(n, m):
    return -(-n // m) * m


def _pad_rows(x, target_rows, value):
    n = x.shape[0]
    if target_rows == n:
        return x
    pad = jnp.full((target_rows - n,) + x.shape[1:], value, x.dtype)
    return jnp.concatenate([x, pad], axis=0)


# ----------------------------------------------------------------------------
# Kernel 1: fused atom MLP + atom_query softmax + SA1 point-MLP + SA1 shortcut.
#   Grid over surface-point tiles; everything channel-first (channels on
#   sublanes, points on lanes).  Layer-1 and shortcut weights are stacked so the
#   26->32 projection and the shortcut are a single pair of matmuls.
# ----------------------------------------------------------------------------
def _embed_sa1_kernel(xq_ref, curv_ref, atom_xyz_ref, atom_types_ref,
                      aw1_ref, ab1_ref, aw2_ref, ab2_ref,
                      wcs_ref, was_ref, bs_ref, w2_ref, b2_ref,
                      h_ref, sc_ref):
    c1 = w2_ref.shape[0]

    # ---- atom MLP (recomputed per query tile; Na is tiny) ----
    t = atom_types_ref[...]                                     # (6, Na)
    af = jnp.dot(aw1_ref[...], t, preferred_element_type=jnp.float32) + ab1_ref[...]
    af = jnp.maximum(af, 0.0)
    af = jnp.dot(aw2_ref[...], af, preferred_element_type=jnp.float32) + ab2_ref[...]
    af = jnp.maximum(af, 0.0)                                   # (16, Na)

    # ---- atom query: softmax(-dist) over atoms, aggregated onto surface points
    xq = xq_ref[...]                                            # (3, TQ)
    ax = atom_xyz_ref[...]                                      # (Na, 3)
    qn2 = jnp.sum(xq * xq, axis=0, keepdims=True)               # (1, TQ)
    an2 = jnp.sum(ax * ax, axis=1, keepdims=True)               # (Na, 1)
    d2 = an2 + qn2 - 2.0 * jnp.dot(ax, xq, preferred_element_type=jnp.float32)
    d = jnp.sqrt(jnp.maximum(d2, 0.0))                          # (Na, TQ)
    logits = -d
    m = jnp.max(logits, axis=0, keepdims=True)                  # (1, TQ)
    e = jnp.exp(logits - m)                                     # (Na, TQ)
    denom = jnp.sum(e, axis=0, keepdims=True)                   # (1, TQ)
    w = e * pl.reciprocal(denom, approx=True)                   # softmax over atoms
    aq = jnp.dot(af, w, preferred_element_type=jnp.float32)     # (16, TQ)

    # ---- SA1 layer-1 + shortcut (stacked weights -> one matmul pair),
    #      concat([curvs, atom_feats]) absorbed via the curv/atom weight split.
    cv = curv_ref[...]                                          # (10, TQ)
    z = (jnp.dot(wcs_ref[...], cv, preferred_element_type=jnp.float32)
         + jnp.dot(was_ref[...], aq, preferred_element_type=jnp.float32)
         + bs_ref[...])                                         # (2*C1, TQ)
    h = jnp.maximum(z[:c1, :], 0.0)
    h = jnp.dot(w2_ref[...], h, preferred_element_type=jnp.float32) + b2_ref[...]
    h_ref[...] = jnp.maximum(h, 0.0)                            # (C1, TQ), >= 0
    sc_ref[...] = z[c1:, :]                                     # shortcut (no relu)


def surf_embed_sa1(surf_xyz_cf, curvs_cf, atom_xyz, atom_types_cf,
                   aw1, ab1, aw2, ab2, wcs, was, bs1, w2, b2, *, tq=TQ):
    c1 = w2.shape[0]
    ns = surf_xyz_cf.shape[1]
    nq = ns // tq

    def full(a):
        return pl.BlockSpec(a.shape, lambda i: (0, 0))

    grid_spec = pltpu.PrefetchScalarGridSpec(
        num_scalar_prefetch=0,
        grid=(nq,),
        in_specs=[
            pl.BlockSpec((3, tq), lambda i: (0, i)),
            pl.BlockSpec((SURF_DIMS, tq), lambda i: (0, i)),
            full(atom_xyz), full(atom_types_cf),
            full(aw1), full(ab1), full(aw2), full(ab2),
            full(wcs), full(was), full(bs1), full(w2), full(b2),
        ],
        out_specs=[pl.BlockSpec((c1, tq), lambda i: (0, i)),
                   pl.BlockSpec((c1, tq), lambda i: (0, i))],
    )
    return pl.pallas_call(
        _embed_sa1_kernel,
        out_shape=(jax.ShapeDtypeStruct((c1, ns), jnp.float32),
                   jax.ShapeDtypeStruct((c1, ns), jnp.float32)),
        grid_spec=grid_spec,
        compiler_params=pltpu.CompilerParams(
            dimension_semantics=("parallel",),
            vmem_limit_bytes=_VMEM_LIMIT),
    )(surf_xyz_cf, curvs_cf, atom_xyz, atom_types_cf,
      aw1, ab1, aw2, ab2, wcs, was, bs1, w2, b2)


# ----------------------------------------------------------------------------
# Kernels 2 & 3: radius-masked running max-pool over neighbour tiles.
#   grid = (query tiles [parallel], neighbour tiles [arbitrary, last]).
#   Per grid step the (C, TQ) running max is carried in REGISTERS and merged
#   back into a VMEM scratch once; per query slab of 8 rows the masked
#   multiply/max temp is (C, 8, 128) = 32 vregs (no (C, TQ, TK) materialization).
#   Zero fill is exact: h >= 0 (ReLU output) and the self point is always in
#   the radius ball, so the true masked max is >= 0.
# ----------------------------------------------------------------------------
def _pool_accumulate(qpm_ref, kcf_ref, hk_ref, acc_ref, radius2):
    k = pl.program_id(1)

    @pl.when(k == 0)
    def _():
        acc_ref[...] = jnp.zeros_like(acc_ref)

    tk = hk_ref.shape[1]
    tq = acc_ref.shape[1]

    kcf = kcf_ref[...]                               # (5, TK) augmented key feats
    acc = acc_ref[...]                               # (C, TQ) running max (8 vregs)
    # hk chunks are 128-lane aligned slices -> clean vector loads.
    hk_chunks = [hk_ref[:, c0:c0 + 128] for c0 in range(0, tk, 128)]

    # one-hot scatter helpers (hoisted out of the slab loop)
    q_iota = jax.lax.broadcasted_iota(jnp.int32, (8, tq), 1)
    s_iota = jax.lax.broadcasted_iota(jnp.int32, (8, tq), 0)

    for s in range(tq // 8):
        q0 = 8 * s
        qs = qpm_ref[q0:q0 + 8, :]                   # (8, 5) query slab (sublane slice)
        # d2[q, k] = |q|^2 + |k|^2 - 2 q.k  via the augmented feature dot product
        d2 = jnp.dot(qs, kcf, preferred_element_type=jnp.float32)       # (8, TK)
        inball = (d2 <= radius2).astype(jnp.float32)                    # (8, TK)
        best = None
        for ci, c0 in enumerate(range(0, tk, 128)):
            cand = hk_chunks[ci][:, None, :] * inball[None, :, c0:c0 + 128]  # (C,8,128)
            best = cand if best is None else jnp.maximum(best, cand)
        red = jnp.max(best, axis=-1)                                    # (C, 8)
        # scatter the slab result into its 8 lanes of the (C, TQ) accumulator
        # with a tiny one-hot matmul (exact: one-hot entries are 0.0 / 1.0).
        scatter = (q_iota == (s_iota + q0)).astype(jnp.float32)         # (8, TQ)
        acc = jnp.maximum(
            acc, jnp.dot(red, scatter, preferred_element_type=jnp.float32))

    acc_ref[...] = acc
    return acc


def _sa_pool_mlp_kernel(qpm_ref, kcf_ref, hk_ref, scq_ref,
                        wcat_ref, bcat_ref, w2_ref, b2_ref,
                        h_ref, sc_ref, acc_ref, *, radius2):
    acc = _pool_accumulate(qpm_ref, kcf_ref, hk_ref, acc_ref, radius2)
    c_out = w2_ref.shape[0]

    @pl.when(pl.program_id(1) == pl.num_programs(1) - 1)
    def _():
        feats = jnp.maximum(acc + scq_ref[...], 0.0)        # SA1 output   (C, TQ)
        # stacked [W1; Ws] -> one matmul covers SA2 layer-1 AND SA2 shortcut
        z = (jnp.dot(wcat_ref[...], feats, preferred_element_type=jnp.float32)
             + bcat_ref[...])                               # (2*C, TQ)
        h = jnp.maximum(z[:c_out, :], 0.0)
        h = jnp.dot(w2_ref[...], h, preferred_element_type=jnp.float32) + b2_ref[...]
        h_ref[...] = jnp.maximum(h, 0.0)                    # SA2 per-point MLP
        sc_ref[...] = z[c_out:, :]                          # SA2 shortcut


def _sa_pool_out_kernel(qpm_ref, kcf_ref, hk_ref, scq_ref, o_ref, acc_ref, *,
                        radius2):
    acc = _pool_accumulate(qpm_ref, kcf_ref, hk_ref, acc_ref, radius2)

    @pl.when(pl.program_id(1) == pl.num_programs(1) - 1)
    def _():
        o_ref[...] = jnp.maximum(acc + scq_ref[...], 0.0)


def sa_pool_then_mlp(q_pm, k_cf, h_cf, sc_cf, wcat, bcat, w2, b2, *,
                     radius, tq=TQ, tk=TK):
    c_pool = h_cf.shape[0]
    c_out = w2.shape[0]
    ns = h_cf.shape[1]
    nq, nk = ns // tq, ns // tk
    kernel = functools.partial(_sa_pool_mlp_kernel, radius2=float(radius) ** 2)

    def full(a):
        return pl.BlockSpec(a.shape, lambda i, k: (0, 0))

    grid_spec = pltpu.PrefetchScalarGridSpec(
        num_scalar_prefetch=0,
        grid=(nq, nk),
        in_specs=[
            pl.BlockSpec((tq, AUG), lambda i, k: (i, 0)),
            pl.BlockSpec((AUG, tk), lambda i, k: (0, k)),
            pl.BlockSpec((c_pool, tk), lambda i, k: (0, k)),
            pl.BlockSpec((c_pool, tq), lambda i, k: (0, i)),
            full(wcat), full(bcat), full(w2), full(b2),
        ],
        out_specs=[pl.BlockSpec((c_out, tq), lambda i, k: (0, i)),
                   pl.BlockSpec((c_out, tq), lambda i, k: (0, i))],
        scratch_shapes=[pltpu.VMEM((c_pool, tq), jnp.float32)],
    )
    return pl.pallas_call(
        kernel,
        out_shape=(jax.ShapeDtypeStruct((c_out, ns), jnp.float32),
                   jax.ShapeDtypeStruct((c_out, ns), jnp.float32)),
        grid_spec=grid_spec,
        compiler_params=pltpu.CompilerParams(
            dimension_semantics=("parallel", "arbitrary"),
            vmem_limit_bytes=_VMEM_LIMIT),
    )(q_pm, k_cf, h_cf, sc_cf, wcat, bcat, w2, b2)


def sa_pool_final(q_pm, k_cf, h_cf, sc_cf, *, radius, tq=TQ, tk=TK):
    c_pool = h_cf.shape[0]
    ns = h_cf.shape[1]
    nq, nk = ns // tq, ns // tk
    kernel = functools.partial(_sa_pool_out_kernel, radius2=float(radius) ** 2)

    grid_spec = pltpu.PrefetchScalarGridSpec(
        num_scalar_prefetch=0,
        grid=(nq, nk),
        in_specs=[
            pl.BlockSpec((tq, AUG), lambda i, k: (i, 0)),
            pl.BlockSpec((AUG, tk), lambda i, k: (0, k)),
            pl.BlockSpec((c_pool, tk), lambda i, k: (0, k)),
            pl.BlockSpec((c_pool, tq), lambda i, k: (0, i)),
        ],
        out_specs=pl.BlockSpec((c_pool, tq), lambda i, k: (0, i)),
        scratch_shapes=[pltpu.VMEM((c_pool, tq), jnp.float32)],
    )
    return pl.pallas_call(
        kernel,
        out_shape=jax.ShapeDtypeStruct((c_pool, ns), jnp.float32),
        grid_spec=grid_spec,
        compiler_params=pltpu.CompilerParams(
            dimension_semantics=("parallel", "arbitrary"),
            vmem_limit_bytes=_VMEM_LIMIT),
    )(q_pm, k_cf, h_cf, sc_cf)


# ----------------------------------------------------------------------------
# Parameter setup (deterministic, synthetic — no checkpoint)
# ----------------------------------------------------------------------------
def _init_linear(key, fan_in, fan_out):
    kw, kb = jax.random.split(key)
    bound = 1.0 / (fan_in ** 0.5)
    w = jax.random.uniform(kw, (fan_in, fan_out), jnp.float32, -bound, bound)
    b = jax.random.uniform(kb, (1, fan_out), jnp.float32, -bound, bound)
    return w, b


def init_params(key):
    keys = jax.random.split(key, 16)
    params = {}
    # Atom_Linear: [6, 16, 16]
    params["atom_w1"], params["atom_b1"] = _init_linear(
        keys[0], ATOM_LINEAR_DIMS[0], ATOM_LINEAR_DIMS[1])
    params["atom_w2"], params["atom_b2"] = _init_linear(
        keys[1], ATOM_LINEAR_DIMS[1], ATOM_LINEAR_DIMS[2])
    # SAModule_res blocks, channels [cin, cmid, cout] with cmid == cout
    params["sa"] = []
    kidx = 2
    for i in range(len(HEAD_MLP) - 1):
        cin, cout = HEAD_MLP[i], HEAD_MLP[i + 1]
        w1, b1 = _init_linear(keys[kidx], cin, cout)
        w2, b2 = _init_linear(keys[kidx + 1], cout, cout)
        ws, bs = _init_linear(keys[kidx + 2], cin, cout)
        kidx += 3
        params["sa"].append(dict(w1=w1, b1=b1, w2=w2, b2=b2, ws=ws, bs=bs))
    return params


# ----------------------------------------------------------------------------
# Backbone forward (mirrors the PyTorch Backbone.forward)
# ----------------------------------------------------------------------------
def backbone_forward(input_dict, params):
    atom_xyz = input_dict["atom"]["xyz"]              # (Na, 3)
    atom_types = input_dict["atom"]["types"]          # (Na, 6)
    surf_xyz = input_dict["surface"]["xyz"]           # (Ns, 3)
    surf_curvs = input_dict["surface"]["curvatures"]  # (Ns, 10)

    na, ns = atom_xyz.shape[0], surf_xyz.shape[0]
    na_p = _round_up(na, 8)
    blk = max(TQ, TK)
    ns_p = _round_up(ns, blk)

    # Pad: fake points sit _FAR away -> zero softmax weight for real queries and
    # outside every real radius ball; their (finite) outputs are sliced off.
    atom_xyz_p = _pad_rows(atom_xyz, na_p, _FAR)
    atom_types_p = _pad_rows(atom_types, na_p, 0.0)
    surf_xyz_p = _pad_rows(surf_xyz, ns_p, _FAR)
    surf_curvs_p = _pad_rows(surf_curvs, ns_p, 0.0)

    # channel-first (lane-dense) layouts used inside the kernels
    types_cf = atom_types_p.T                          # (6, Na)
    surf_xyz_cf = surf_xyz_p.T                         # (3, Ns)
    curvs_cf = surf_curvs_p.T                          # (10, Ns)

    # Augmented coordinate features for the pairwise-distance matmul identity:
    #   q_pm[q] . k_cf[:, k] = |q|^2 + |k|^2 - 2 q.k
    sq = jnp.sum(surf_xyz_p * surf_xyz_p, axis=1, keepdims=True)      # (Ns, 1)
    one = jnp.ones_like(sq)
    q_pm = jnp.concatenate([surf_xyz_p, sq, one], axis=1)             # (Ns, 5)
    k_cf = jnp.concatenate([-2.0 * surf_xyz_p, one, sq], axis=1).T    # (5, Ns)

    # ---- weight plumbing (transposed to channel-first; layer1+shortcut stacked)
    aw1, ab1 = params["atom_w1"].T, params["atom_b1"].T
    aw2, ab2 = params["atom_w2"].T, params["atom_b2"].T

    p1 = params["sa"][0]
    w1_cf, ws_cf = p1["w1"].T, p1["ws"].T                             # (32, 26)
    wcs = jnp.concatenate([w1_cf[:, :SURF_DIMS], ws_cf[:, :SURF_DIMS]], axis=0)
    was = jnp.concatenate([w1_cf[:, SURF_DIMS:], ws_cf[:, SURF_DIMS:]], axis=0)
    bs1 = jnp.concatenate([p1["b1"].T, p1["bs"].T], axis=0)           # (64, 1)

    p2 = params["sa"][1]
    wcat2 = jnp.concatenate([p2["w1"].T, p2["ws"].T], axis=0)         # (64, 32)
    bcat2 = jnp.concatenate([p2["b1"].T, p2["bs"].T], axis=0)         # (64, 1)

    # ---- 1) atom MLP + atom_query + SA1 point MLP / shortcut -> (32, Ns) x2
    h1, s1 = surf_embed_sa1(
        surf_xyz_cf, curvs_cf, atom_xyz_p, types_cf,
        aw1, ab1, aw2, ab2, wcs, was, bs1, p1["w2"].T, p1["b2"].T, tq=TQ)

    # ---- 2) SA1 radius max-pool + residual, fused with SA2 point MLP / shortcut
    h2, s2 = sa_pool_then_mlp(q_pm, k_cf, h1, s1, wcat2, bcat2,
                              p2["w2"].T, p2["b2"].T,
                              radius=SURF_RADIUS, tq=TQ, tk=TK)

    # ---- 3) SA2 radius max-pool + residual -> final features (32, Ns)
    out_cf = sa_pool_final(q_pm, k_cf, h2, s2, radius=SURF_RADIUS, tq=TQ, tk=TK)

    # already channel-first: (1, C, N), padded points dropped — no transpose needed
    return out_cf[None, :, :ns]


# ----------------------------------------------------------------------------
# Main
# ----------------------------------------------------------------------------
if __name__ == "__main__":
    key = jax.random.PRNGKey(0)
    k_in, k_par = jax.random.split(key)
    k1, k2, k3, k4 = jax.random.split(k_in, 4)

    N_ATOM, N_SURF = 32, 512
    input_dict = {
        "atom": {
            "xyz": jax.random.uniform(k1, (N_ATOM, 3), jnp.float32),
            "types": jax.random.uniform(k2, (N_ATOM, ATOM_DIMS), jnp.float32),
        },
        "surface": {
            "xyz": jax.random.uniform(k3, (N_SURF, 3), jnp.float32),
            "curvatures": jax.random.normal(k4, (N_SURF, SURF_DIMS), jnp.float32),
        },
    }

    params = init_params(k_par)

    out = backbone_forward(input_dict, params)
    out = jax.block_until_ready(out)

    assert out.shape == (1, SURF_HEAD_MLP[-1], N_SURF), out.shape
    assert out.dtype == jnp.float32
    assert bool(jnp.all(jnp.isfinite(out)))
    print("KERNEL_OK")
</pallas_src>

<mosaic_0001>
module attributes {stable_mosaic.version = 11 : i64} {
  func.func @_embed_sa1_kernel(%arg0: i32, %arg1: memref<3x256xf32, #tpu.memory_space<vmem>>, %arg2: memref<10x256xf32, #tpu.memory_space<vmem>>, %arg3: memref<32x3xf32, #tpu.memory_space<vmem>>, %arg4: memref<6x32xf32, #tpu.memory_space<vmem>>, %arg5: memref<16x6xf32, #tpu.memory_space<vmem>>, %arg6: memref<16x1xf32, #tpu.memory_space<vmem>>, %arg7: memref<16x16xf32, #tpu.memory_space<vmem>>, %arg8: memref<16x1xf32, #tpu.memory_space<vmem>>, %arg9: memref<64x10xf32, #tpu.memory_space<vmem>>, %arg10: memref<64x16xf32, #tpu.memory_space<vmem>>, %arg11: memref<64x1xf32, #tpu.memory_space<vmem>>, %arg12: memref<32x32xf32, #tpu.memory_space<vmem>>, %arg13: memref<32x1xf32, #tpu.memory_space<vmem>>, %arg14: memref<32x256xf32, #tpu.memory_space<vmem>>, %arg15: memref<32x256xf32, #tpu.memory_space<vmem>>) attributes {dimension_semantics = [#tpu.dimension_semantics<parallel>], iteration_bounds = array<i64: 2>, scalar_prefetch = 0 : i64, scratch_operands = 0 : i64, tpu.core_type = #tpu.core_type<tc>, window_params = [{transform_indices = @transform_0, window_bounds = array<i64: 3, 256>}, {transform_indices = @transform_1, window_bounds = array<i64: 10, 256>}, {pipeline_mode = #tpu.pipeline_mode<synchronous>, transform_indices = @transform_2, window_bounds = array<i64: 32, 3>}, {pipeline_mode = #tpu.pipeline_mode<synchronous>, transform_indices = @transform_3, window_bounds = array<i64: 6, 32>}, {pipeline_mode = #tpu.pipeline_mode<synchronous>, transform_indices = @transform_4, window_bounds = array<i64: 16, 6>}, {pipeline_mode = #tpu.pipeline_mode<synchronous>, transform_indices = @transform_5, window_bounds = array<i64: 16, 1>}, {pipeline_mode = #tpu.pipeline_mode<synchronous>, transform_indices = @transform_6, window_bounds = array<i64: 16, 16>}, {pipeline_mode = #tpu.pipeline_mode<synchronous>, transform_indices = @transform_7, window_bounds = array<i64: 16, 1>}, {pipeline_mode = #tpu.pipeline_mode<synchronous>, transform_indices = @transform_8, window_bounds = array<i64: 64, 10>}, {pipeline_mode = #tpu.pipeline_mode<synchronous>, transform_indices = @transform_9, window_bounds = array<i64: 64, 16>}, {pipeline_mode = #tpu.pipeline_mode<synchronous>, transform_indices = @transform_10, window_bounds = array<i64: 64, 1>}, {pipeline_mode = #tpu.pipeline_mode<synchronous>, transform_indices = @transform_11, window_bounds = array<i64: 32, 32>}, {pipeline_mode = #tpu.pipeline_mode<synchronous>, transform_indices = @transform_12, window_bounds = array<i64: 32, 1>}, {transform_indices = @transform_13, window_bounds = array<i64: 32, 256>}, {transform_indices = @transform_14, window_bounds = array<i64: 32, 256>}]} {
    %c0 = arith.constant 0 : index
    %c0_0 = arith.constant 0 : index
    %0 = vector.load %arg4[%c0, %c0_0] : memref<6x32xf32, #tpu.memory_space<vmem>>, vector<6x32xf32>
    %c0_1 = arith.constant 0 : index
    %c0_2 = arith.constant 0 : index
    %1 = vector.load %arg5[%c0_1, %c0_2] : memref<16x6xf32, #tpu.memory_space<vmem>>, vector<16x6xf32>
    %cst = arith.constant dense<0.000000e+00> : vector<16x32xf32>
    %2 = tpu.matmul %1, %0, %cst {dimension_numbers = #tpu.dot_dimension_numbers<[1], [0], [0], [1], [0, 0, 1, 1], [], []>} : vector<16x6xf32>, vector<6x32xf32>, vector<16x32xf32> -> vector<16x32xf32>
    %c0_3 = arith.constant 0 : index
    %c0_4 = arith.constant 0 : index
    %3 = vector.load %arg6[%c0_3, %c0_4] : memref<16x1xf32, #tpu.memory_space<vmem>>, vector<16x1xf32>
    %4 = vector.broadcast %3 : vector<16x1xf32> to vector<16x32xf32>
    %5 = arith.addf %2, %4 : vector<16x32xf32>
    %cst_5 = arith.constant 0.000000e+00 : f32
    %6 = vector.broadcast %cst_5 : f32 to vector<16x32xf32>
    %7 = arith.maximumf %5, %6 : vector<16x32xf32>
    %c0_6 = arith.constant 0 : index
    %c0_7 = arith.constant 0 : index
    %8 = vector.load %arg7[%c0_6, %c0_7] : memref<16x16xf32, #tpu.memory_space<vmem>>, vector<16x16xf32>
    %cst_8 = arith.constant dense<0.000000e+00> : vector<16x32xf32>
    %9 = tpu.matmul %8, %7, %cst_8 {dimension_numbers = #tpu.dot_dimension_numbers<[1], [0], [0], [1], [0, 0, 1, 1], [], []>} : vector<16x16xf32>, vector<16x32xf32>, vector<16x32xf32> -> vector<16x32xf32>
    %c0_9 = arith.constant 0 : index
    %c0_10 = arith.constant 0 : index
    %10 = vector.load %arg8[%c0_9, %c0_10] : memref<16x1xf32, #tpu.memory_space<vmem>>, vector<16x1xf32>
    %11 = vector.broadcast %10 : vector<16x1xf32> to vector<16x32xf32>
    %12 = arith.addf %9, %11 : vector<16x32xf32>
    %cst_11 = arith.constant 0.000000e+00 : f32
    %13 = vector.broadcast %cst_11 : f32 to vector<16x32xf32>
    %14 = arith.maximumf %12, %13 : vector<16x32xf32>
    %c0_12 = arith.constant 0 : index
    %c0_13 = arith.constant 0 : index
    %15 = vector.load %arg1[%c0_12, %c0_13] : memref<3x256xf32, #tpu.memory_space<vmem>>, vector<3x256xf32>
    %c0_14 = arith.constant 0 : index
    %c0_15 = arith.constant 0 : index
    %16 = vector.load %arg3[%c0_14, %c0_15] : memref<32x3xf32, #tpu.memory_space<vmem>>, vector<32x3xf32>
    %17 = arith.mulf %15, %15 : vector<3x256xf32>
    %cst_16 = arith.constant dense<0.000000e+00> : vector<256xf32>
    %18 = vector.multi_reduction <add>, %17, %cst_16 [0] : vector<3x256xf32> to vector<256xf32>
    %19 = vector.shape_cast %18 : vector<256xf32> to vector<1x256xf32>
    %20 = arith.mulf %16, %16 : vector<32x3xf32>
    %cst_17 = arith.constant dense<0.000000e+00> : vector<32xf32>
    %21 = vector.multi_reduction <add>, %20, %cst_17 [1] : vector<32x3xf32> to vector<32xf32>
    %22 = vector.shape_cast %21 : vector<32xf32> to vector<32x1xf32>
    %23 = vector.broadcast %22 : vector<32x1xf32> to vector<32x256xf32>
    %24 = vector.broadcast %19 : vector<1x256xf32> to vector<32x256xf32>
    %25 = arith.addf %23, %24 : vector<32x256xf32>
    %cst_18 = arith.constant dense<0.000000e+00> : vector<32x256xf32>
    %26 = tpu.matmul %16, %15, %cst_18 {dimension_numbers = #tpu.dot_dimension_numbers<[1], [0], [0], [1], [0, 0, 1, 1], [], []>} : vector<32x3xf32>, vector<3x256xf32>, vector<32x256xf32> -> vector<32x256xf32>
    %cst_19 = arith.constant 2.000000e+00 : f32
    %27 = vector.broadcast %cst_19 : f32 to vector<32x256xf32>
    %28 = arith.mulf %27, %26 : vector<32x256xf32>
    %29 = arith.subf %25, %28 : vector<32x256xf32>
    %cst_20 = arith.constant 0.000000e+00 : f32
    %30 = vector.broadcast %cst_20 : f32 to vector<32x256xf32>
    %31 = arith.maximumf %29, %30 : vector<32x256xf32>
    %32 = math.sqrt %31 : vector<32x256xf32>
    %cst_21 = arith.constant 0.000000e+00 : f32
    %33 = vector.broadcast %cst_21 : f32 to vector<32x256xf32>
    %34 = arith.subf %33, %32 : vector<32x256xf32>
    %cst_22 = arith.constant dense<0xFF800000> : vector<256xf32>
    %35 = vector.multi_reduction <maximumf>, %34, %cst_22 [0] : vector<32x256xf32> to vector<256xf32>
    %36 = vector.shape_cast %35 : vector<256xf32> to vector<1x256xf32>
    %37 = vector.broadcast %36 : vector<1x256xf32> to vector<32x256xf32>
    %38 = arith.subf %34, %37 : vector<32x256xf32>
    %39 = math.exp %38 : vector<32x256xf32>
    %cst_23 = arith.constant dense<0.000000e+00> : vector<256xf32>
    %40 = vector.multi_reduction <add>, %39, %cst_23 [0] : vector<32x256xf32> to vector<256xf32>
    %41 = vector.shape_cast %40 : vector<256xf32> to vector<1x256xf32>
    %42 = tpu.reciprocal %41 {approx = true} : vector<1x256xf32> -> vector<1x256xf32>
    %43 = vector.broadcast %42 : vector<1x256xf32> to vector<32x256xf32>
    %44 = arith.mulf %39, %43 : vector<32x256xf32>
    %cst_24 = arith.constant dense<0.000000e+00> : vector<16x256xf32>
    %45 = tpu.matmul %14, %44, %cst_24 {dimension_numbers = #tpu.dot_dimension_numbers<[1], [0], [0], [1], [0, 0, 1, 1], [], []>} : vector<16x32xf32>, vector<32x256xf32>, vector<16x256xf32> -> vector<16x256xf32>
    %c0_25 = arith.constant 0 : index
    %c0_26 = arith.constant 0 : index
    %46 = vector.load %arg2[%c0_25, %c0_26] : memref<10x256xf32, #tpu.memory_space<vmem>>, vector<10x256xf32>
    %c0_27 = arith.constant 0 : index
    %c0_28 = arith.constant 0 : index
    %47 = vector.load %arg9[%c0_27, %c0_28] : memref<64x10xf32, #tpu.memory_space<vmem>>, vector<64x10xf32>
    %cst_29 = arith.constant dense<0.000000e+00> : vector<64x256xf32>
    %48 = tpu.matmul %47, %46, %cst_29 {dimension_numbers = #tpu.dot_dimension_numbers<[1], [0], [0], [1], [0, 0, 1, 1], [], []>} : vector<64x10xf32>, vector<10x256xf32>, vector<64x256xf32> -> vector<64x256xf32>
    %c0_30 = arith.constant 0 : index
    %c0_31 = arith.constant 0 : index
    %49 = vector.load %arg10[%c0_30, %c0_31] : memref<64x16xf32, #tpu.memory_space<vmem>>, vector<64x16xf32>
    %cst_32 = arith.constant dense<0.000000e+00> : vector<64x256xf32>
    %50 = tpu.matmul %49, %45, %cst_32 {dimension_numbers = #tpu.dot_dimension_numbers<[1], [0], [0], [1], [0, 0, 1, 1], [], []>} : vector<64x16xf32>, vector<16x256xf32>, vector<64x256xf32> -> vector<64x256xf32>
    %51 = arith.addf %48, %50 : vector<64x256xf32>
    %c0_33 = arith.constant 0 : index
    %c0_34 = arith.constant 0 : index
    %52 = vector.load %arg11[%c0_33, %c0_34] : memref<64x1xf32, #tpu.memory_space<vmem>>, vector<64x1xf32>
    %53 = vector.broadcast %52 : vector<64x1xf32> to vector<64x256xf32>
    %54 = arith.addf %51, %53 : vector<64x256xf32>
    %55 = vector.extract_strided_slice %54 {offsets = [0, 0], sizes = [32, 256], strides = [1, 1]} : vector<64x256xf32> to vector<32x256xf32>
    %cst_35 = arith.constant 0.000000e+00 : f32
    %56 = vector.broadcast %cst_35 : f32 to vector<32x256xf32>
    %57 = arith.maximumf %55, %56 : vector<32x256xf32>
    %c0_36 = arith.constant 0 : index
    %c0_37 = arith.constant 0 : index
    %58 = vector.load %arg12[%c0_36, %c0_37] : memref<32x32xf32, #tpu.memory_space<vmem>>, vector<32x32xf32>
    %cst_38 = arith.constant dense<0.000000e+00> : vector<32x256xf32>
    %59 = tpu.matmul %58, %57, %cst_38 {dimension_numbers = #tpu.dot_dimension_numbers<[1], [0], [0], [1], [0, 0, 1, 1], [], []>} : vector<32x32xf32>, vector<32x256xf32>, vector<32x256xf32> -> vector<32x256xf32>
    %c0_39 = arith.constant 0 : index
    %c0_40 = arith.constant 0 : index
    %60 = vector.load %arg13[%c0_39, %c0_40] : memref<32x1xf32, #tpu.memory_space<vmem>>, vector<32x1xf32>
    %61 = vector.broadcast %60 : vector<32x1xf32> to vector<32x256xf32>
    %62 = arith.addf %59, %61 : vector<32x256xf32>
    %cst_41 = arith.constant 0.000000e+00 : f32
    %63 = vector.broadcast %cst_41 : f32 to vector<32x256xf32>
    %64 = arith.maximumf %62, %63 : vector<32x256xf32>
    %c0_42 = arith.constant 0 : index
    %c0_43 = arith.constant 0 : index
    %65 = vector.load %arg14[%c0_42, %c0_43] : memref<32x256xf32, #tpu.memory_space<vmem>>, vector<32x256xf32>
    tpu.vector_store %arg14[%c0_42, %c0_43], %64 {strides = array<i32>} : memref<32x256xf32, #tpu.memory_space<vmem>>, vector<32x256xf32>,
    %66 = vector.extract_strided_slice %54 {offsets = [32, 0], sizes = [32, 256], strides = [1, 1]} : vector<64x256xf32> to vector<32x256xf32>
    %c0_44 = arith.constant 0 : index
    %c0_45 = arith.constant 0 : index
    %67 = vector.load %arg15[%c0_44, %c0_45] : memref<32x256xf32, #tpu.memory_space<vmem>>, vector<32x256xf32>
    tpu.vector_store %arg15[%c0_44, %c0_45], %66 {strides = array<i32>} : memref<32x256xf32, #tpu.memory_space<vmem>>, vector<32x256xf32>,
    return
  }
  func.func @transform_0(%arg0: i32) -> (i32, i32) {
    %c0_i32 = arith.constant 0 : i32
    %c0_i32_0 = arith.constant 0 : i32
    return %c0_i32, %arg0 : i32, i32
  }
  func.func @transform_1(%arg0: i32) -> (i32, i32) {
    %c0_i32 = arith.constant 0 : i32
    %c0_i32_0 = arith.constant 0 : i32
    return %c0_i32, %arg0 : i32, i32
  }
  func.func @transform_2(%arg0: i32) -> (i32, i32) {
    %c0_i32 = arith.constant 0 : i32
    %c0_i32_0 = arith.constant 0 : i32
    %c0_i32_1 = arith.constant 0 : i32
    return %c0_i32, %c0_i32_0 : i32, i32
  }
  func.func @transform_3(%arg0: i32) -> (i32, i32) {
    %c0_i32 = arith.constant 0 : i32
    %c0_i32_0 = arith.constant 0 : i32
    %c0_i32_1 = arith.constant 0 : i32
    return %c0_i32, %c0_i32_0 : i32, i32
  }
  func.func @transform_4(%arg0: i32) -> (i32, i32) {
    %c0_i32 = arith.constant 0 : i32
    %c0_i32_0 = arith.constant 0 : i32
    %c0_i32_1 = arith.constant 0 : i32
    return %c0_i32, %c0_i32_0 : i32, i32
  }
  func.func @transform_5(%arg0: i32) -> (i32, i32) {
    %c0_i32 = arith.constant 0 : i32
    %c0_i32_0 = arith.constant 0 : i32
    %c0_i32_1 = arith.constant 0 : i32
    return %c0_i32, %c0_i32_0 : i32, i32
  }
  func.func @transform_6(%arg0: i32) -> (i32, i32) {
    %c0_i32 = arith.constant 0 : i32
    %c0_i32_0 = arith.constant 0 : i32
    %c0_i32_1 = arith.constant 0 : i32
    return %c0_i32, %c0_i32_0 : i32, i32
  }
  func.func @transform_7(%arg0: i32) -> (i32, i32) {
    %c0_i32 = arith.constant 0 : i32
    %c0_i32_0 = arith.constant 0 : i32
    %c0_i32_1 = arith.constant 0 : i32
    return %c0_i32, %c0_i32_0 : i32, i32
  }
  func.func @transform_8(%arg0: i32) -> (i32, i32) {
    %c0_i32 = arith.constant 0 : i32
    %c0_i32_0 = arith.constant 0 : i32
    %c0_i32_1 = arith.constant 0 : i32
    return %c0_i32, %c0_i32_0 : i32, i32
  }
  func.func @transform_9(%arg0: i32) -> (i32, i32) {
    %c0_i32 = arith.constant 0 : i32
    %c0_i32_0 = arith.constant 0 : i32
    %c0_i32_1 = arith.constant 0 : i32
    return %c0_i32, %c0_i32_0 : i32, i32
  }
  func.func @transform_10(%arg0: i32) -> (i32, i32) {
    %c0_i32 = arith.constant 0 : i32
    %c0_i32_0 = arith.constant 0 : i32
    %c0_i32_1 = arith.constant 0 : i32
    return %c0_i32, %c0_i32_0 : i32, i32
  }
  func.func @transform_11(%arg0: i32) -> (i32, i32) {
    %c0_i32 = arith.constant 0 : i32
    %c0_i32_0 = arith.constant 0 : i32
    %c0_i32_1 = arith.constant 0 : i32
    return %c0_i32, %c0_i32_0 : i32, i32
  }
  func.func @transform_12(%arg0: i32) -> (i32, i32) {
    %c0_i32 = arith.constant 0 : i32
    %c0_i32_0 = arith.constant 0 : i32
    %c0_i32_1 = arith.constant 0 : i32
    return %c0_i32, %c0_i32_0 : i32, i32
  }
  func.func @transform_13(%arg0: i32) -> (i32, i32) {
    %c0_i32 = arith.constant 0 : i32
    %c0_i32_0 = arith.constant 0 : i32
    return %c0_i32, %arg0 : i32, i32
  }
  func.func @transform_14(%arg0: i32) -> (i32, i32) {
    %c0_i32 = arith.constant 0 : i32
    %c0_i32_0 = arith.constant 0 : i32
    return %c0_i32, %arg0 : i32, i32
  }
}

</mosaic_0001>

<llo_original>
// kernel: tpu_custom_call.1
$region0: #{tpu_custom_call.1}
  #allocation0 [shape = 'u32[]', space=smem, size = 0x4, offset = 0x4, fixed_abs, tag = 'smem constant byte address 0x4 - core index']
  #allocation1 [shape = 'u32[72,128]{1,0:T(1,128)}', space=vmem, size = 0x9000, scoped, tag = 'internal scratch']
  %s0 = inlined_call_operand.vmem [shape: f32[3,512], index: 0, kind: input, shape index: {}]
  %s1 = inlined_call_operand.vmem [shape: f32[10,512], index: 1, kind: input, shape index: {}]
  %s2 = inlined_call_operand.vmem [shape: f32[32,3], index: 2, kind: input, shape index: {}]
  %s3 = inlined_call_operand.vmem [shape: f32[6,32], index: 3, kind: input, shape index: {}]
  %s4 = inlined_call_operand.vmem [shape: f32[16,6], index: 4, kind: input, shape index: {}]
  %s5 = inlined_call_operand.vmem [shape: f32[16,1], index: 5, kind: input, shape index: {}]
  %s6 = inlined_call_operand.vmem [shape: f32[16,16], index: 6, kind: input, shape index: {}]
  %s7 = inlined_call_operand.vmem [shape: f32[16,1], index: 7, kind: input, shape index: {}]
  %s8 = inlined_call_operand.vmem [shape: f32[64,10], index: 8, kind: input, shape index: {}]
  %s9 = inlined_call_operand.vmem [shape: f32[64,16], index: 9, kind: input, shape index: {}]
  %s10 = inlined_call_operand.vmem [shape: f32[64,1], index: 10, kind: input, shape index: {}]
  %s11 = inlined_call_operand.vmem [shape: f32[32,32], index: 11, kind: input, shape index: {}]
  %s12 = inlined_call_operand.vmem [shape: f32[32,1], index: 12, kind: input, shape index: {}]
  %s13 = inlined_call_operand.hbm [shape: f32[32,512], index: 13, kind: output, shape index: {0}]
  %s14 = inlined_call_operand.hbm [shape: f32[32,512], index: 14, kind: output, shape index: {1}]
  %15 = xla_tuple %s13, %s14
  %s16 = sld [smem:[#allocation0]]
  $region116: #{tpu_custom_call.1} parent=0
    _
  %s18 = ssub.s32 1, %s16
  %s19 = scalar_select 0, %s18, %s16
  $region1: #{tpu_custom_call.1} parent=0
    #allocation2 [shape = 'u8[32768]{0}', space=vmem, size = 0x8000, scoped, tag = 'input window, operand 1']
    #allocation3 [shape = 'u8[65536]{0}', space=vmem, size = 0x10000, scoped, tag = 'output window, operand 0']
    #allocation4 [shape = 's32[2]{0}', space=sflag, size = 0x8, scoped, tag = 'scoped memory for tpu_custom_call.1']
    #allocation5 [shape = 'u8[65536]{0}', space=vmem, size = 0x10000, scoped, tag = 'output window, operand 1']
    #allocation6 [shape = 's32[2]{0}', space=sflag, size = 0x8, scoped, tag = 'scoped memory for tpu_custom_call.1']
    %20 = vsyncpa [#allocation4], 0
    %s21 = scalar_lea.sflag [#allocation4], 1
    %22 = vsyncpa %s21, 0
    %23 = vsyncpa [#allocation6], 0
    %s24 = scalar_lea.sflag [#allocation6], 1
    %25 = vsyncpa %s24, 0
    loop: start=0, step=1, limit=4
    $region2: #{tpu_custom_call.1} parent=1 // loop_pre_header
      _
    $region3: #{tpu_custom_call.1} parent=1 // loop_header
      %s27 = sphi 0, %s31
      %p28 = scmp.ge.s32.totalorder %s27, 4
      %s37 = sphi 0, %s39
      %s40 = sphi 0, %s37
      %s41 = sphi 0, %s40
      %s57 = sphi 0, %s41
      %s63 = sphi 0, %s65
      %s66 = sphi 0, %s63
      %s67 = sphi 0, %s66
      %s83 = sphi 0, %s67
      %s87 = sphi 0, %s87
      %s89 = sphi 0, %s87
      %s90 = sphi 0, %s89
      %s104 = sphi 0, %s90
      %s108 = sphi 0, %s108
      %s110 = sphi 0, %s108
      %s111 = sphi 0, %s110
      %s125 = sphi 0, %s111
      %s129 = sphi 0, %s129
      %s131 = sphi 0, %s129
      %s132 = sphi 0, %s131
      %s146 = sphi 0, %s132
      %s150 = sphi 0, %s150
      %s152 = sphi 0, %s150
      %s153 = sphi 0, %s152
      %s167 = sphi 0, %s153
      %s171 = sphi 0, %s171
      %s173 = sphi 0, %s171
      %s174 = sphi 0, %s173
      %s188 = sphi 0, %s174
      %s192 = sphi 0, %s192
      %s194 = sphi 0, %s192
      %s195 = sphi 0, %s194
      %s209 = sphi 0, %s195
      %s213 = sphi 0, %s213
      %s215 = sphi 0, %s213
      %s216 = sphi 0, %s215
      %s230 = sphi 0, %s216
      %s234 = sphi 0, %s234
      %s236 = sphi 0, %s234
      %s237 = sphi 0, %s236
      %s251 = sphi 0, %s237
      %s255 = sphi 0, %s255
      %s257 = sphi 0, %s255
      %s258 = sphi 0, %s257
      %s272 = sphi 0, %s258
      %s276 = sphi 0, %s276
      %s278 = sphi 0, %s276
      %s279 = sphi 0, %s278
      %s293 = sphi 0, %s279
      %s297 = sphi 0, %s297
      %s299 = sphi 0, %s297
      %s300 = sphi 0, %s299
      %s314 = sphi 0, %s300
      %s320 = sphi 0, %s322
      %s323 = sphi 0, %s320
      %s324 = sphi 0, %s323
      %s340 = sphi 0, %s324
      %s346 = sphi 0, %s348
      %s349 = sphi 0, %s346
      %s350 = sphi 0, %s349
      %s366 = sphi 0, %s350
    $region4: #{tpu_custom_call.1} parent=1 // loop_header_branch
      %30 = sbr.rel (%p28) target = $region8
    $region5: #{tpu_custom_call.1} parent=1 // loop_body
      %s32 = ssub.s32 %s27, 1
      %s33 = ssub.s32 %s27, 2
      %s34 = sadd.s32 %s27, 1
      %s35 = ssub.s32 %s27, %s34
      %p36 = scmp.eq.s32.totalorder %s35, 0
      %s38 = sadd.s32 %s37, 1
      %s39 = scalar_select %p36, %s37, %s38
      %p42 = pneg %p36
      %p43 = scmp.eq.s32.totalorder %s27, 1
      %p44 = por %p42, %p43
      %p45 = scmp.ne.s32.totalorder %s37, %s40
      %p46 = scmp.eq.s32.totalorder %s27, 0
      %p47 = por %p45, %p46
      %p48 = scmp.ne.s32.totalorder %s37, %s40
      %p49 = scmp.eq.s32.totalorder %s32, 1
      %p50 = por %p48, %p49
      %p51 = scmp.ne.s32.totalorder %s40, %s41
      %p52 = scmp.eq.s32.totalorder %s32, 0
      %p53 = por %p51, %p52
      %p54 = scmp.ne.s32.totalorder %s40, %s41
      %p55 = scmp.eq.s32.totalorder %s33, 1
      %p56 = por %p54, %p55
      %p58 = scmp.ne.s32.totalorder %s41, %s57
      %p59 = scmp.eq.s32.totalorder %s33, 0
      %p60 = por %p58, %p59
      %s61 = ssub.s32 %s27, %s34
      %p62 = scmp.eq.s32.totalorder %s61, 0
      %s64 = sadd.s32 %s63, 1
      %s65 = scalar_select %p62, %s63, %s64
      %p68 = pneg %p62
      %p69 = scmp.eq.s32.totalorder %s27, 1
      %p70 = por %p68, %p69
      %p71 = scmp.ne.s32.totalorder %s63, %s66
      %p72 = scmp.eq.s32.totalorder %s27, 0
      %p73 = por %p71, %p72
      %p74 = scmp.ne.s32.totalorder %s63, %s66
      %p75 = scmp.eq.s32.totalorder %s32, 1
      %p76 = por %p74, %p75
      %p77 = scmp.ne.s32.totalorder %s66, %s67
      %p78 = scmp.eq.s32.totalorder %s32, 0
      %p79 = por %p77, %p78
      %p80 = scmp.ne.s32.totalorder %s66, %s67
      %p81 = scmp.eq.s32.totalorder %s33, 1
      %p82 = por %p80, %p81
      %p84 = scmp.ne.s32.totalorder %s67, %s83
      %p85 = scmp.eq.s32.totalorder %s33, 0
      %p86 = por %p84, %p85
      %s88 = sadd.s32 %s87, 1
      %p91 = scmp.eq.s32.totalorder %s27, 1
      %p92 = scmp.ne.s32.totalorder %s87, %s89
      %p93 = scmp.eq.s32.totalorder %s27, 0
      %p94 = por %p92, %p93
      %p95 = scmp.ne.s32.totalorder %s87, %s89
      %p96 = scmp.eq.s32.totalorder %s32, 1
      %p97 = por %p95, %p96
      %p98 = scmp.ne.s32.totalorder %s89, %s90
      %p99 = scmp.eq.s32.totalorder %s32, 0
      %p100 = por %p98, %p99
      %p101 = scmp.ne.s32.totalorder %s89, %s90
      %p102 = scmp.eq.s32.totalorder %s33, 1
      %p103 = por %p101, %p102
      %p105 = scmp.ne.s32.totalorder %s90, %s104
      %p106 = scmp.eq.s32.totalorder %s33, 0
      %p107 = por %p105, %p106
      %s109 = sadd.s32 %s108, 1
      %p112 = scmp.eq.s32.totalorder %s27, 1
      %p113 = scmp.ne.s32.totalorder %s108, %s110
      %p114 = scmp.eq.s32.totalorder %s27, 0
      %p115 = por %p113, %p114
      %p116 = scmp.ne.s32.totalorder %s108, %s110
      %p117 = scmp.eq.s32.totalorder %s32, 1
      %p118 = por %p116, %p117
      %p119 = scmp.ne.s32.totalorder %s110, %s111
      %p120 = scmp.eq.s32.totalorder %s32, 0
      %p121 = por %p119, %p120
      %p122 = scmp.ne.s32.totalorder %s110, %s111
      %p123 = scmp.eq.s32.totalorder %s33, 1
      %p124 = por %p122, %p123
      %p126 = scmp.ne.s32.totalorder %s111, %s125
      %p127 = scmp.eq.s32.totalorder %s33, 0
      %p128 = por %p126, %p127
      %s130 = sadd.s32 %s129, 1
      %p133 = scmp.eq.s32.totalorder %s27, 1
      %p134 = scmp.ne.s32.totalorder %s129, %s131
      %p135 = scmp.eq.s32.totalorder %s27, 0
      %p136 = por %p134, %p135
      %p137 = scmp.ne.s32.totalorder %s129, %s131
      %p138 = scmp.eq.s32.totalorder %s32, 1
      %p139 = por %p137, %p138
      %p140 = scmp.ne.s32.totalorder %s131, %s132
      %p141 = scmp.eq.s32.totalorder %s32, 0
      %p142 = por %p140, %p141
      %p143 = scmp.ne.s32.totalorder %s131, %s132
      %p144 = scmp.eq.s32.totalorder %s33, 1
      %p145 = por %p143, %p144
      %p147 = scmp.ne.s32.totalorder %s132, %s146
      %p148 = scmp.eq.s32.totalorder %s33, 0
      %p149 = por %p147, %p148
      %s151 = sadd.s32 %s150, 1
      %p154 = scmp.eq.s32.totalorder %s27, 1
      %p155 = scmp.ne.s32.totalorder %s150, %s152
      %p156 = scmp.eq.s32.totalorder %s27, 0
      %p157 = por %p155, %p156
      %p158 = scmp.ne.s32.totalorder %s150, %s152
      %p159 = scmp.eq.s32.totalorder %s32, 1
      %p160 = por %p158, %p159
      %p161 = scmp.ne.s32.totalorder %s152, %s153
      %p162 = scmp.eq.s32.totalorder %s32, 0
      %p163 = por %p161, %p162
      %p164 = scmp.ne.s32.totalorder %s152, %s153
      %p165 = scmp.eq.s32.totalorder %s33, 1
      %p166 = por %p164, %p165
      %p168 = scmp.ne.s32.totalorder %s153, %s167
      %p169 = scmp.eq.s32.totalorder %s33, 0
      %p170 = por %p168, %p169
      %s172 = sadd.s32 %s171, 1
      %p175 = scmp.eq.s32.totalorder %s27, 1
      %p176 = scmp.ne.s32.totalorder %s171, %s173
      %p177 = scmp.eq.s32.totalorder %s27, 0
      %p178 = por %p176, %p177
      %p179 = scmp.ne.s32.totalorder %s171, %s173
      %p180 = scmp.eq.s32.totalorder %s32, 1
      %p181 = por %p179, %p180
      %p182 = scmp.ne.s32.totalorder %s173, %s174
      %p183 = scmp.eq.s32.totalorder %s32, 0
      %p184 = por %p182, %p183
      %p185 = scmp.ne.s32.totalorder %s173, %s174
      %p186 = scmp.eq.s32.totalorder %s33, 1
      %p187 = por %p185, %p186
      %p189 = scmp.ne.s32.totalorder %s174, %s188
      %p190 = scmp.eq.s32.totalorder %s33, 0
      %p191 = por %p189, %p190
      %s193 = sadd.s32 %s192, 1
      %p196 = scmp.eq.s32.totalorder %s27, 1
      %p197 = scmp.ne.s32.totalorder %s192, %s194
      %p198 = scmp.eq.s32.totalorder %s27, 0
      %p199 = por %p197, %p198
      %p200 = scmp.ne.s32.totalorder %s192, %s194
      %p201 = scmp.eq.s32.totalorder %s32, 1
      %p202 = por %p200, %p201
      %p203 = scmp.ne.s32.totalorder %s194, %s195
      %p204 = scmp.eq.s32.totalorder %s32, 0
      %p205 = por %p203, %p204
      %p206 = scmp.ne.s32.totalorder %s194, %s195
      %p207 = scmp.eq.s32.totalorder %s33, 1
      %p208 = por %p206, %p207
      %p210 = scmp.ne.s32.totalorder %s195, %s209
      %p211 = scmp.eq.s32.totalorder %s33, 0
      %p212 = por %p210, %p211
      %s214 = sadd.s32 %s213, 1
      %p217 = scmp.eq.s32.totalorder %s27, 1
      %p218 = scmp.ne.s32.totalorder %s213, %s215
      %p219 = scmp.eq.s32.totalorder %s27, 0
      %p220 = por %p218, %p219
      %p221 = scmp.ne.s32.totalorder %s213, %s215
      %p222 = scmp.eq.s32.totalorder %s32, 1
      %p223 = por %p221, %p222
      %p224 = scmp.ne.s32.totalorder %s215, %s216
      %p225 = scmp.eq.s32.totalorder %s32, 0
      %p226 = por %p224, %p225
      %p227 = scmp.ne.s32.totalorder %s215, %s216
      %p228 = scmp.eq.s32.totalorder %s33, 1
      %p229 = por %p227, %p228
      %p231 = scmp.ne.s32.totalorder %s216, %s230
      %p232 = scmp.eq.s32.totalorder %s33, 0
      %p233 = por %p231, %p232
      %s235 = sadd.s32 %s234, 1
      %p238 = scmp.eq.s32.totalorder %s27, 1
      %p239 = scmp.ne.s32.totalorder %s234, %s236
      %p240 = scmp.eq.s32.totalorder %s27, 0
      %p241 = por %p239, %p240
      %p242 = scmp.ne.s32.totalorder %s234, %s236
      %p243 = scmp.eq.s32.totalorder %s32, 1
      %p244 = por %p242, %p243
      %p245 = scmp.ne.s32.totalorder %s236, %s237
      %p246 = scmp.eq.s32.totalorder %s32, 0
      %p247 = por %p245, %p246
      %p248 = scmp.ne.s32.totalorder %s236, %s237
      %p249 = scmp.eq.s32.totalorder %s33, 1
      %p250 = por %p248, %p249
      %p252 = scmp.ne.s32.totalorder %s237, %s251
      %p253 = scmp.eq.s32.totalorder %s33, 0
      %p254 = por %p252, %p253
      %s256 = sadd.s32 %s255, 1
      %p259 = scmp.eq.s32.totalorder %s27, 1
      %p260 = scmp.ne.s32.totalorder %s255, %s257
      %p261 = scmp.eq.s32.totalorder %s27, 0
      %p262 = por %p260, %p261
      %p263 = scmp.ne.s32.totalorder %s255, %s257
      %p264 = scmp.eq.s32.totalorder %s32, 1
      %p265 = por %p263, %p264
      %p266 = scmp.ne.s32.totalorder %s257, %s258
      %p267 = scmp.eq.s32.totalorder %s32, 0
      %p268 = por %p266, %p267
      %p269 = scmp.ne.s32.totalorder %s257, %s258
      %p270 = scmp.eq.s32.totalorder %s33, 1
      %p271 = por %p269, %p270
      %p273 = scmp.ne.s32.totalorder %s258, %s272
      %p274 = scmp.eq.s32.totalorder %s33, 0
      %p275 = por %p273, %p274
      %s277 = sadd.s32 %s276, 1
      %p280 = scmp.eq.s32.totalorder %s27, 1
      %p281 = scmp.ne.s32.totalorder %s276, %s278
      %p282 = scmp.eq.s32.totalorder %s27, 0
      %p283 = por %p281, %p282
      %p284 = scmp.ne.s32.totalorder %s276, %s278
      %p285 = scmp.eq.s32.totalorder %s32, 1
      %p286 = por %p284, %p285
      %p287 = scmp.ne.s32.totalorder %s278, %s279
      %p288 = scmp.eq.s32.totalorder %s32, 0
      %p289 = por %p287, %p288
      %p290 = scmp.ne.s32.totalorder %s278, %s279
      %p291 = scmp.eq.s32.totalorder %s33, 1
      %p292 = por %p290, %p291
      %p294 = scmp.ne.s32.totalorder %s279, %s293
      %p295 = scmp.eq.s32.totalorder %s33, 0
      %p296 = por %p294, %p295
      %s298 = sadd.s32 %s297, 1
      %p301 = scmp.eq.s32.totalorder %s27, 1
      %p302 = scmp.ne.s32.totalorder %s297, %s299
      %p303 = scmp.eq.s32.totalorder %s27, 0
      %p304 = por %p302, %p303
      %p305 = scmp.ne.s32.totalorder %s297, %s299
      %p306 = scmp.eq.s32.totalorder %s32, 1
      %p307 = por %p305, %p306
      %p308 = scmp.ne.s32.totalorder %s299, %s300
      %p309 = scmp.eq.s32.totalorder %s32, 0
      %p310 = por %p308, %p309
      %p311 = scmp.ne.s32.totalorder %s299, %s300
      %p312 = scmp.eq.s32.totalorder %s33, 1
      %p313 = por %p311, %p312
      %p315 = scmp.ne.s32.totalorder %s300, %s314
      %p316 = scmp.eq.s32.totalorder %s33, 0
      %p317 = por %p315, %p316
      %s318 = ssub.s32 %s27, %s34
      %p319 = scmp.eq.s32.totalorder %s318, 0
      %s321 = sadd.s32 %s320, 1
      %s322 = scalar_select %p319, %s320, %s321
      %p325 = pneg %p319
      %p326 = scmp.eq.s32.totalorder %s27, 1
      %p327 = por %p325, %p326
      %p328 = scmp.ne.s32.totalorder %s320, %s323
      %p329 = scmp.eq.s32.totalorder %s27, 0
      %p330 = por %p328, %p329
      %p331 = scmp.ne.s32.totalorder %s320, %s323
      %p332 = scmp.eq.s32.totalorder %s32, 1
      %p333 = por %p331, %p332
      %p334 = scmp.ne.s32.totalorder %s323, %s324
      %p335 = scmp.eq.s32.totalorder %s32, 0
      %p336 = por %p334, %p335
      %p337 = scmp.ne.s32.totalorder %s323, %s324
      %p338 = scmp.eq.s32.totalorder %s33, 1
      %p339 = por %p337, %p338
      %p341 = scmp.ne.s32.totalorder %s324, %s340
      %p342 = scmp.eq.s32.totalorder %s33, 0
      %p343 = por %p341, %p342
      %s344 = ssub.s32 %s27, %s34
      %p345 = scmp.eq.s32.totalorder %s344, 0
      %s347 = sadd.s32 %s346, 1
      %s348 = scalar_select %p345, %s346, %s347
      %p351 = pneg %p345
      %p352 = scmp.eq.s32.totalorder %s27, 1
      %p353 = por %p351, %p352
      %p354 = scmp.ne.s32.totalorder %s346, %s349
      %p355 = scmp.eq.s32.totalorder %s27, 0
      %p356 = por %p354, %p355
      %p357 = scmp.ne.s32.totalorder %s346, %s349
      %p358 = scmp.eq.s32.totalorder %s32, 1
      %p359 = por %p357, %p358
      %p360 = scmp.ne.s32.totalorder %s349, %s350
      %p361 = scmp.eq.s32.totalorder %s32, 0
      %p362 = por %p360, %p361
      %p363 = scmp.ne.s32.totalorder %s349, %s350
      %p364 = scmp.eq.s32.totalorder %s33, 1
      %p365 = por %p363, %p364
      %p367 = scmp.ne.s32.totalorder %s350, %s366
      %p368 = scmp.eq.s32.totalorder %s33, 0
      %p369 = por %p367, %p368
      %p370 = scmp.le.s32.totalorder 1, %s27
      %p371 = scmp.lt.s32.totalorder %s27, 3
      %p372 = pnand %p370, %p371
      %p373 = pneg %p372
      // Predicated region
      $region9: #{tpu_custom_call.1} parent=5 // pred_check
        _
      $region10: #{tpu_custom_call.1} parent=5 // pred_check_branch
        %375 = sbr.rel (%p372) target = $region12
      $region11: #{tpu_custom_call.1} parent=5 // pred_region
        %s376 = ssub.s32 %s27, 1
        // Predicated region
        $region13: #{tpu_custom_call.1} parent=11 // pred_check
          %p377 = pneg %p100
        $region14: #{tpu_custom_call.1} parent=11 // pred_check_branch
          %379 = sbr.rel (%p377) target = $region16
        $region15: #{tpu_custom_call.1} parent=11 // pred_region
          _
        $region16: #{tpu_custom_call.1} parent=11 // pred_fallthru
          _
        // Predicated region
        $region17: #{tpu_custom_call.1} parent=11 // pred_check
          %p380 = pneg %p121
        $region18: #{tpu_custom_call.1} parent=11 // pred_check_branch
          %382 = sbr.rel (%p380) target = $region20
        $region19: #{tpu_custom_call.1} parent=11 // pred_region
          _
        $region20: #{tpu_custom_call.1} parent=11 // pred_fallthru
          _
        // Predicated region
        $region21: #{tpu_custom_call.1} parent=11 // pred_check
          %p383 = pneg %p142
        $region22: #{tpu_custom_call.1} parent=11 // pred_check_branch
          %385 = sbr.rel (%p383) target = $region24
        $region23: #{tpu_custom_call.1} parent=11 // pred_region
          _
        $region24: #{tpu_custom_call.1} parent=11 // pred_fallthru
          _
        // Predicated region
        $region25: #{tpu_custom_call.1} parent=11 // pred_check
          %p386 = pneg %p163
        $region26: #{tpu_custom_call.1} parent=11 // pred_check_branch
          %388 = sbr.rel (%p386) target = $region28
        $region27: #{tpu_custom_call.1} parent=11 // pred_region
          _
        $region28: #{tpu_custom_call.1} parent=11 // pred_fallthru
          _
        // Predicated region
        $region29: #{tpu_custom_call.1} parent=11 // pred_check
          %p389 = pneg %p184
        $region30: #{tpu_custom_call.1} parent=11 // pred_check_branch
          %391 = sbr.rel (%p389) target = $region32
        $region31: #{tpu_custom_call.1} parent=11 // pred_region
          _
        $region32: #{tpu_custom_call.1} parent=11 // pred_fallthru
          _
        // Predicated region
        $region33: #{tpu_custom_call.1} parent=11 // pred_check
          %p392 = pneg %p205
        $region34: #{tpu_custom_call.1} parent=11 // pred_check_branch
          %394 = sbr.rel (%p392) target = $region36
        $region35: #{tpu_custom_call.1} parent=11 // pred_region
          _
        $region36: #{tpu_custom_call.1} parent=11 // pred_fallthru
          _
        // Predicated region
        $region37: #{tpu_custom_call.1} parent=11 // pred_check
          %p395 = pneg %p226
        $region38: #{tpu_custom_call.1} parent=11 // pred_check_branch
          %397 = sbr.rel (%p395) target = $region40
        $region39: #{tpu_custom_call.1} parent=11 // pred_region
          _
        $region40: #{tpu_custom_call.1} parent=11 // pred_fallthru
          _
        // Predicated region
        $region41: #{tpu_custom_call.1} parent=11 // pred_check
          %p398 = pneg %p247
        $region42: #{tpu_custom_call.1} parent=11 // pred_check_branch
          %400 = sbr.rel (%p398) target = $region44
        $region43: #{tpu_custom_call.1} parent=11 // pred_region
          _
        $region44: #{tpu_custom_call.1} parent=11 // pred_fallthru
          _
        // Predicated region
        $region45: #{tpu_custom_call.1} parent=11 // pred_check
          %p401 = pneg %p268
        $region46: #{tpu_custom_call.1} parent=11 // pred_check_branch
          %403 = sbr.rel (%p401) target = $region48
        $region47: #{tpu_custom_call.1} parent=11 // pred_region
          _
        $region48: #{tpu_custom_call.1} parent=11 // pred_fallthru
          _
        // Predicated region
        $region49: #{tpu_custom_call.1} parent=11 // pred_check
          %p404 = pneg %p289
        $region50: #{tpu_custom_call.1} parent=11 // pred_check_branch
          %406 = sbr.rel (%p404) target = $region52
        $region51: #{tpu_custom_call.1} parent=11 // pred_region
          _
        $region52: #{tpu_custom_call.1} parent=11 // pred_fallthru
          _
        // Predicated region
        $region53: #{tpu_custom_call.1} parent=11 // pred_check
          %p407 = pneg %p310
        $region54: #{tpu_custom_call.1} parent=11 // pred_check_branch
          %409 = sbr.rel (%p407) target = $region56
        $region55: #{tpu_custom_call.1} parent=11 // pred_region
          _
        $region56: #{tpu_custom_call.1} parent=11 // pred_fallthru
          _
      $region12: #{tpu_custom_call.1} parent=5 // pred_fallthru
        _
      %p410 = scmp.lt.s32.totalorder %s27, 2
      // Predicated region
      $region57: #{tpu_custom_call.1} parent=5 // pred_check
        %p411 = pneg %p410
      $region58: #{tpu_custom_call.1} parent=5 // pred_check_branch
        %413 = sbr.rel (%p411) target = $region60
      $region59: #{tpu_custom_call.1} parent=5 // pred_region
        // Predicated region
        $region61: #{tpu_custom_call.1} parent=59 // pred_check
          %p414 = pneg %p47
        $region62: #{tpu_custom_call.1} parent=59 // pred_check_branch
          %416 = sbr.rel (%p414) target = $region64
        $region63: #{tpu_custom_call.1} parent=59 // pred_region
          %s417 = smul.u32 2, %s27
          %p418 = scmp.lt.s32.totalorder %s417, 3
          %s419 = scalar_select %p418, %s417, 3
          %s420 = smul.addr %s419, 4
          %s421 = scalar_lea.vmem %s0, %s420
          %s422 = smul.u32 2, %s27
        $region64: #{tpu_custom_call.1} parent=59 // pred_fallthru
          _
        // Predicated region
        $region65: #{tpu_custom_call.1} parent=59 // pred_check
          %p423 = pneg %p73
        $region66: #{tpu_custom_call.1} parent=59 // pred_check_branch
          %425 = sbr.rel (%p423) target = $region68
        $region67: #{tpu_custom_call.1} parent=59 // pred_region
          %s426 = sand.u32 %s63, 1
          %s427 = sand.u32 %s63, 1
          %s428 = smul.addr %s427, 32
          %s429 = scalar_lea.vmem [#allocation2], %s428
          %s430 = smul.u32 2, %s27
          %s431 = smul.addr %s430, 8
          %s432 = scalar_lea.vmem %s1, %s431
          // Predicated region
          $region69: #{tpu_custom_call.1} parent=67 // pred_check
            _
          $region70: #{tpu_custom_call.1} parent=67 // pred_check_branch
            %434 = sbr.rel (0) target = $region72
          $region71: #{tpu_custom_call.1} parent=67 // pred_region
            // Predicated region
            $region73: #{tpu_custom_call.1} parent=71 // pred_check
              _
            $region74: #{tpu_custom_call.1} parent=71 // pred_check_branch
              %436 = sbr.rel (0) target = $region76
            $region75: #{tpu_custom_call.1} parent=71 // pred_region
              loop: start=0, step=1, limit=1
              $region77: #{tpu_custom_call.1} parent=75 // loop_pre_header
                _
              $region78: #{tpu_custom_call.1} parent=75 // loop_header
                %s438 = sphi 0, %s442
                %p439 = scmp.ge.s32.totalorder %s438, 1
                %s443 = sphi %s432, %s432
                %s444 = sphi %s429, %s429
              $region79: #{tpu_custom_call.1} parent=75 // loop_header_branch
                %441 = sbr.rel (%p439) target = $region83
              $region80: #{tpu_custom_call.1} parent=75 // loop_body
                %v445 = vld [vmem:[%s443] sm:$0xff]
                %446 = vst [vmem:[%s444] sm:$0xff] %v445
                %v447 = vld [vmem:[%s443 + $0x8] sm:$0xff]
                %448 = vst [vmem:[%s444 + $0x8] sm:$0xff] %v447
                %v449 = vld [vmem:[%s443 + $0x20] sm:$0xff]
                %450 = vst [vmem:[%s444 + $0x10] sm:$0xff] %v449
                %v451 = vld [vmem:[%s443 + $0x28] sm:$0xff]
                %452 = vst [vmem:[%s444 + $0x18] sm:$0xff] %v451
              $region81: #{tpu_custom_call.1} parent=75 // loop_footer
                %s442 = sadd.s32 1, %s438
              $region82: #{tpu_custom_call.1} parent=75 // loop_footer_branch
                %437 = sbr.rel target = $region78
              $region83: #{tpu_custom_call.1} parent=75 // loop_exit
                _
            $region76: #{tpu_custom_call.1} parent=71 // pred_fallthru
              _
            // Predicated region
            $region84: #{tpu_custom_call.1} parent=71 // pred_check
              _
            $region85: #{tpu_custom_call.1} parent=71 // pred_check_branch
              %454 = sbr.rel target = $region87
            $region86: #{tpu_custom_call.1} parent=71 // pred_region
              _
            $region87: #{tpu_custom_call.1} parent=71 // pred_fallthru
              _
          $region72: #{tpu_custom_call.1} parent=67 // pred_fallthru
            _
          %455 = vnop
        $region68: #{tpu_custom_call.1} parent=59 // pred_fallthru
          _
      $region60: #{tpu_custom_call.1} parent=5 // pred_fallthru
        _
      %p456 = scmp.le.s32.totalorder 1, %s27
      %p457 = scmp.lt.s32.totalorder %s27, 3
      %p458 = pnand %p456, %p457
      %p459 = pneg %p458
      // Predicated region
      $region88: #{tpu_custom_call.1} parent=5 // pred_check
        _
      $region89: #{tpu_custom_call.1} parent=5 // pred_check_branch
        %461 = sbr.rel (%p458) target = $region91
      $region90: #{tpu_custom_call.1} parent=5 // pred_region
        %s462 = ssub.s32 %s27, 1
        %s463 = sand.u32 %s66, 1
        %s464 = sand.u32 %s66, 1
        %s465 = smul.addr %s464, 32
        %s466 = scalar_lea.vmem [#allocation2], %s465
        // Predicated region
        $region92: #{tpu_custom_call.1} parent=90 // pred_check
          %p467 = pneg %p79
        $region93: #{tpu_custom_call.1} parent=90 // pred_check_branch
          %469 = sbr.rel (%p467) target = $region95
        $region94: #{tpu_custom_call.1} parent=90 // pred_region
          _
        $region95: #{tpu_custom_call.1} parent=90 // pred_fallthru
          _
        %s470 = smul.u32 2, %s32
        %p471 = scmp.lt.s32.totalorder %s470, 3
        %s472 = scalar_select %p471, %s470, 3
        %s473 = smul.addr %s472, 4
        %s474 = scalar_lea.vmem %s0, %s473
        %p475 = pneg %p53
        %p476 = pneg %p50
        %s477 = sand.u32 %s66, 1
        %s478 = sand.u32 %s66, 1
        %s479 = smul.addr %s478, 32
        %s480 = scalar_lea.vmem [#allocation2], %s479
        %p481 = pneg %p79
        %p482 = pneg %p76
        %p483 = pneg %p100
        %p484 = pneg %p97
        %p485 = pneg %p121
        %p486 = pneg %p118
        %p487 = pneg %p142
        %p488 = pneg %p139
        %p489 = pneg %p163
        %p490 = pneg %p160
        %p491 = pneg %p184
        %p492 = pneg %p181
        %p493 = pneg %p205
        %p494 = pneg %p202
        %p495 = pneg %p226
        %p496 = pneg %p223
        %p497 = pneg %p247
        %p498 = pneg %p244
        %p499 = pneg %p268
        %p500 = pneg %p265
        %p501 = pneg %p289
        %p502 = pneg %p286
        %p503 = pneg %p310
        %p504 = pneg %p307
        %p505 = pneg %p336
        %p506 = pneg %p333
        %s507 = sand.u32 %s323, 1
        %s508 = scalar_lea.sflag [#allocation4], %s507
        %s509 = sand.u32 %s323, 1
        %s510 = smul.addr %s509, 64
        %s511 = scalar_lea.vmem [#allocation3], %s510
        %p512 = pneg %p362
        %p513 = pneg %p359
        %s514 = sand.u32 %s349, 1
        %s515 = scalar_lea.sflag [#allocation6], %s514
        %s516 = sand.u32 %s349, 1
        %s517 = smul.addr %s516, 64
        %s518 = scalar_lea.vmem [#allocation5], %s517
        %s519 = smul.u32 2, %s32
        %p520 = scmp.lt.s32.totalorder %s519, 3
        %s521 = scalar_select %p520, %s519, 3
        %s522 = smul.addr %s521, 4
        %s523 = scalar_lea.vmem %s0, %s522
        %s524 = smul.u32 2, %s32
        %s525 = smul.u32 2, %s32
        %s526 = smul.u32 2, %s32
        %s527 = smul.u32 2, %s32
        %v528 = vld [vmem:[%s3] sm:$0x3f]
        %v529 = vld [vmem:[%s4] sm:$0xff]
        %v530 = vld [vmem:[%s4 + $0x8] sm:$0xff]
        %v531 = vld [vmem:[%s5] sm:$0xff]
        %v532 = vld [vmem:[%s5 + $0x8] sm:$0xff]
        %534 = vset.pattern.permute.xlu0 0
        %535 = vperm.xlu0 %534, %v531
        %v536 = vpop.permute.xlu0 %535
        %539 = vset.pattern.permute.xlu0 0
        %540 = vperm.xlu0 %539, %v532
        %v541 = vpop.permute.xlu0 %540
        %vm543 = vcmask 48128
        %v545 = vsel %vm543, %v529, 0
        %v548 = vsel %vm543, %v530, 0
        %vm550 = vcmask 1045504
        %v552 = vsel %vm550, %v528, 0
        %554 = vmatpush.msra.mxu0 0.0
        %555 = vmatpush.msra.mxu0 0.0
        %556 = vmatpush.msra.mxu0 0.0
        %557 = vmatpush.msra.mxu0 0.0
        %558 = vmatpush.msra.mxu0 0.0
        %559 = vmatpush.msra.mxu0 0.0
        %560 = vmatpush.msra.mxu0 0.0
        %561 = vmatpush.msra.mxu0 0.0
        %562 = vmatpush.msra.mxu0 0.0
        %563 = vmatpush.msra.mxu0 0.0
        %564 = vmatpush.msra.mxu0 0.0
        %565 = vmatpush.msra.mxu0 0.0
        %566 = vmatpush.msra.mxu0 0.0
        %567 = vmatpush.msra.mxu0 0.0
        %568 = vmatpush.msra.mxu0 0.0
        %569 = vmatpush.msra.mxu0 %v552
        %570 = vmatmul.f32.gmra.mxu0 %v545
        %v571 = vpop.f32.mrf.mxu0
        %v572 = vadd.f32 %v536, %v571
        %573 = vmatmul.f32.gmra.mxu0 %v548
        %v574 = vpop.f32.mrf.mxu0
        %v575 = vadd.f32 %v541, %v574
        %576 = vdwg.mxu0
        %v577 = vmax.f32 %v572, 0.0
        %v578 = vmax.f32 %v575, 0.0
        %v579 = vld [vmem:[%s6] sm:$0xff]
        %v580 = vld [vmem:[%s6 + $0x8] sm:$0xff]
        %v581 = vld [vmem:[%s7] sm:$0xff]
        %v582 = vld [vmem:[%s7 + $0x8] sm:$0xff]
        %584 = vset.pattern.permute.xlu0 0
        %585 = vperm.xlu0 %584, %v581
        %v586 = vpop.permute.xlu0 %585
        %589 = vset.pattern.permute.xlu0 0
        %590 = vperm.xlu0 %589, %v582
        %v591 = vpop.permute.xlu0 %590
        %vm593 = vcmask 130048
        %v595 = vsel %vm593, %v579, 0
        %v598 = vsel %vm593, %v580, 0
        %600 = vmatpush.msra.mxu0 0.0
        %601 = vmatpush.msra.mxu0 0.0
        %602 = vmatpush.msra.mxu0 0.0
        %603 = vmatpush.msra.mxu0 0.0
        %604 = vmatpush.msra.mxu0 0.0
        %605 = vmatpush.msra.mxu0 0.0
        %606 = vmatpush.msra.mxu0 0.0
        %607 = vmatpush.msra.mxu0 0.0
        %608 = vmatpush.msra.mxu0 0.0
        %609 = vmatpush.msra.mxu0 0.0
        %610 = vmatpush.msra.mxu0 0.0
        %611 = vmatpush.msra.mxu0 0.0
        %612 = vmatpush.msra.mxu0 0.0
        %613 = vmatpush.msra.mxu0 0.0
        %614 = vmatpush.msra.mxu0 %v578
        %615 = vmatpush.msra.mxu0 %v577
        %616 = vmatmul.f32.gmra.mxu0 %v595
        %v617 = vpop.f32.mrf.mxu0
        %v618 = vadd.f32 %v586, %v617
        %619 = vmatmul.f32.gmra.mxu0 %v598
        %v620 = vpop.f32.mrf.mxu0
        %v621 = vadd.f32 %v591, %v620
        %622 = vdwg.mxu0
        %v623 = vmax.f32 %v618, 0.0
        %v624 = vmax.f32 %v621, 0.0
        %v625 = vld [vmem:[%s523] sm:$0x77]
        %v626 = vld [vmem:[%s2] sm:$0xff]
        %v627 = vld [vmem:[%s2 + $0x8] sm:$0xff]
        %v628 = vld [vmem:[%s2 + $0x10] sm:$0xff]
        %v629 = vld [vmem:[%s2 + $0x18] sm:$0xff]
        %v630 = vmul.f32 %v625, %v625
        %632 = vst [vmem:[#allocation1] ss:$2 sm:$0xff] %v630
        %v633 = vld.sshfl [vmem:[#allocation1] sm:$0xff pattern:$0x75316420]
        %v634 = vld.sshfl [vmem:[#allocation1 + $0x8] sm:$0xff pattern:$0x75316420]
        %vm637 = vcmask 1042432
        %v638 = vsel %vm637, %v633, 0.0
        %v639 = vrot.slane %v638, 4
        %v640 = vadd.f32 %v638, %v639
        %v641 = vrot.slane %v640, 2
        %v642 = vadd.f32 %v640, %v641
        %v643 = vrot.slane %v642, 1
        %v644 = vadd.f32 %v642, %v643
        %v645 = vsel %vm637, %v634, 0.0
        %v646 = vrot.slane %v645, 4
        %v647 = vadd.f32 %v645, %v646
        %v648 = vrot.slane %v647, 2
        %v649 = vadd.f32 %v647, %v648
        %v650 = vrot.slane %v649, 1
        %v651 = vadd.f32 %v649, %v650
        %v652 = vmul.f32 %v626, %v626
        %v653 = vmul.f32 %v627, %v627
        %v654 = vmul.f32 %v628, %v628
        %v655 = vmul.f32 %v629, %v629
        %vm656 = vcmask 23552
        %v657 = vsel %vm656, %v652, 0.0
        %658 = vadd.xlane.f32.xlu0 %v657
        %v659 = vpop.xlane.xlu0 %658
        %v660 = vsel %vm656, %v653, 0.0
        %661 = vadd.xlane.f32.xlu0 %v660
        %v662 = vpop.xlane.xlu0 %661
        %v663 = vsel %vm656, %v654, 0.0
        %664 = vadd.xlane.f32.xlu0 %v663
        %v665 = vpop.xlane.xlu0 %664
        %v666 = vsel %vm656, %v655, 0.0
        %667 = vadd.xlane.f32.xlu0 %v666
        %v668 = vpop.xlane.xlu0 %667
        %v669 = vadd.f32 %v659, %v644
        %v670 = vadd.f32 %v659, %v651
        %v671 = vadd.f32 %v662, %v644
        %v672 = vadd.f32 %v662, %v651
        %v673 = vadd.f32 %v665, %v644
        %v674 = vadd.f32 %v665, %v651
        %v675 = vadd.f32 %v668, %v644
        %v676 = vadd.f32 %v668, %v651
        %678 = vst [vmem:[#allocation1] ss:$2 sm:$0xff] %v625
        %v679 = vld.sshfl [vmem:[#allocation1] sm:$0xff pattern:$0x75316420]
        %v680 = vld.sshfl [vmem:[#allocation1 + $0x8] sm:$0xff pattern:$0x75316420]
        %v682 = vsel %vm656, %v626, 0
        %v685 = vsel %vm656, %v627, 0
        %v688 = vsel %vm656, %v628, 0
        %v691 = vsel %vm656, %v629, 0
        %v693 = vsel %vm637, %v679, 0
        %v695 = vsel %vm637, %v680, 0
        %697 = vmatpush.msra.mxu0 0.0
        %698 = vmatpush.msra.mxu0 0.0
        %699 = vmatpush.msra.mxu0 0.0
        %700 = vmatpush.msra.mxu0 0.0
        %701 = vmatpush.msra.mxu0 0.0
        %702 = vmatpush.msra.mxu0 0.0
        %703 = vmatpush.msra.mxu0 0.0
        %704 = vmatpush.msra.mxu0 0.0
        %705 = vmatpush.msra.mxu0 0.0
        %706 = vmatpush.msra.mxu0 0.0
        %707 = vmatpush.msra.mxu0 0.0
        %708 = vmatpush.msra.mxu0 0.0
        %709 = vmatpush.msra.mxu0 0.0
        %710 = vmatpush.msra.mxu0 0.0
        %711 = vmatpush.msra.mxu0 0.0
        %712 = vmatpush.msra.mxu0 %v693
        %713 = vmatmul.f32.gmra.mxu0 %v682
        %v714 = vpop.f32.mrf.mxu0
        %v715 = vadd.f32 0.0, %v714
        %716 = vmatmul.f32.gmra.mxu0 %v685
        %v717 = vpop.f32.mrf.mxu0
        %v718 = vadd.f32 0.0, %v717
        %719 = vmatmul.f32.gmra.mxu0 %v688
        %v720 = vpop.f32.mrf.mxu0
        %v721 = vadd.f32 0.0, %v720
        %722 = vmatmul.f32.gmra.mxu0 %v691
        %v723 = vpop.f32.mrf.mxu0
        %v724 = vadd.f32 0.0, %v723
        %725 = vdwg.mxu0
        %726 = vmatpush.msra.mxu0 0.0
        %727 = vmatpush.msra.mxu0 0.0
        %728 = vmatpush.msra.mxu0 0.0
        %729 = vmatpush.msra.mxu0 0.0
        %730 = vmatpush.msra.mxu0 0.0
        %731 = vmatpush.msra.mxu0 0.0
        %732 = vmatpush.msra.mxu0 0.0
        %733 = vmatpush.msra.mxu0 0.0
        %734 = vmatpush.msra.mxu0 0.0
        %735 = vmatpush.msra.mxu0 0.0
        %736 = vmatpush.msra.mxu0 0.0
        %737 = vmatpush.msra.mxu0 0.0
        %738 = vmatpush.msra.mxu0 0.0
        %739 = vmatpush.msra.mxu0 0.0
        %740 = vmatpush.msra.mxu0 0.0
        %741 = vmatpush.msra.mxu0 %v695
        %742 = vmatmul.f32.gmra.mxu0 %v682
        %v743 = vpop.f32.mrf.mxu0
        %v744 = vadd.f32 0.0, %v743
        %745 = vmatmul.f32.gmra.mxu0 %v685
        %v746 = vpop.f32.mrf.mxu0
        %v747 = vadd.f32 0.0, %v746
        %748 = vmatmul.f32.gmra.mxu0 %v688
        %v749 = vpop.f32.mrf.mxu0
        %v750 = vadd.f32 0.0, %v749
        %751 = vmatmul.f32.gmra.mxu0 %v691
        %v752 = vpop.f32.mrf.mxu0
        %v753 = vadd.f32 0.0, %v752
        %754 = vdwg.mxu0
        %v755 = vmul.f32 %v715, 2.0
        %v756 = vmul.f32 %v744, 2.0
        %v757 = vmul.f32 %v718, 2.0
        %v758 = vmul.f32 %v747, 2.0
        %v759 = vmul.f32 %v721, 2.0
        %v760 = vmul.f32 %v750, 2.0
        %v761 = vmul.f32 %v724, 2.0
        %v762 = vmul.f32 %v753, 2.0
        %v763 = vsub.f32 %v669, %v755
        %v764 = vsub.f32 %v670, %v756
        %v765 = vsub.f32 %v671, %v757
        %v766 = vsub.f32 %v672, %v758
        %v767 = vsub.f32 %v673, %v759
        %v768 = vsub.f32 %v674, %v760
        %v769 = vsub.f32 %v675, %v761
        %v770 = vsub.f32 %v676, %v762
        %v771 = vmax.f32 %v763, 0.0
        %v772 = vmax.f32 %v764, 0.0
        %v773 = vmax.f32 %v765, 0.0
        %v774 = vmax.f32 %v766, 0.0
        %v775 = vmax.f32 %v767, 0.0
        %v776 = vmax.f32 %v768, 0.0
        %v777 = vmax.f32 %v769, 0.0
        %v778 = vmax.f32 %v770, 0.0
        %v779 = vrsqrt.pop %v771
        %v780 = vmul.f32 %v779, %v771
        %v781 = vmul.f32 %v780, %v779
        %v782 = vmul.f32 0.5, %v781
        %v783 = vsub.f32 1.5, %v782
        %v784 = vmul.f32 %v779, %v783
        %v785 = vmul.f32 %v771, %v784
        %vm786 = vcmp.eq.f32.partialorder %v771, inf
        %v787 = vsel %vm786, %v771, %v785
        %vm788 = vcmp.eq.f32.partialorder %v771, 0.0
        %v789 = vand.u32 %v771, 2147483648
        %v790 = vsel %vm788, %v789, %v787
        %v791 = vrsqrt.pop %v772
        %v792 = vmul.f32 %v791, %v772
        %v793 = vmul.f32 %v792, %v791
        %v794 = vmul.f32 0.5, %v793
        %v795 = vsub.f32 1.5, %v794
        %v796 = vmul.f32 %v791, %v795
        %v797 = vmul.f32 %v772, %v796
        %vm798 = vcmp.eq.f32.partialorder %v772, inf
        %v799 = vsel %vm798, %v772, %v797
        %vm800 = vcmp.eq.f32.partialorder %v772, 0.0
        %v801 = vand.u32 %v772, 2147483648
        %v802 = vsel %vm800, %v801, %v799
        %v803 = vrsqrt.pop %v773
        %v804 = vmul.f32 %v803, %v773
        %v805 = vmul.f32 %v804, %v803
        %v806 = vmul.f32 0.5, %v805
        %v807 = vsub.f32 1.5, %v806
        %v808 = vmul.f32 %v803, %v807
        %v809 = vmul.f32 %v773, %v808
        %vm810 = vcmp.eq.f32.partialorder %v773, inf
        %v811 = vsel %vm810, %v773, %v809
        %vm812 = vcmp.eq.f32.partialorder %v773, 0.0
        %v813 = vand.u32 %v773, 2147483648
        %v814 = vsel %vm812, %v813, %v811
        %v815 = vrsqrt.pop %v774
        %v816 = vmul.f32 %v815, %v774
        %v817 = vmul.f32 %v816, %v815
        %v818 = vmul.f32 0.5, %v817
        %v819 = vsub.f32 1.5, %v818
        %v820 = vmul.f32 %v815, %v819
        %v821 = vmul.f32 %v774, %v820
        %vm822 = vcmp.eq.f32.partialorder %v774, inf
        %v823 = vsel %vm822, %v774, %v821
        %vm824 = vcmp.eq.f32.partialorder %v774, 0.0
        %v825 = vand.u32 %v774, 2147483648
        %v826 = vsel %vm824, %v825, %v823
        %v827 = vrsqrt.pop %v775
        %v828 = vmul.f32 %v827, %v775
        %v829 = vmul.f32 %v828, %v827
        %v830 = vmul.f32 0.5, %v829
        %v831 = vsub.f32 1.5, %v830
        %v832 = vmul.f32 %v827, %v831
        %v833 = vmul.f32 %v775, %v832
        %vm834 = vcmp.eq.f32.partialorder %v775, inf
        %v835 = vsel %vm834, %v775, %v833
        %vm836 = vcmp.eq.f32.partialorder %v775, 0.0
        %v837 = vand.u32 %v775, 2147483648
        %v838 = vsel %vm836, %v837, %v835
        %v839 = vrsqrt.pop %v776
        %v840 = vmul.f32 %v839, %v776
        %v841 = vmul.f32 %v840, %v839
        %v842 = vmul.f32 0.5, %v841
        %v843 = vsub.f32 1.5, %v842
        %v844 = vmul.f32 %v839, %v843
        %v845 = vmul.f32 %v776, %v844
        %vm846 = vcmp.eq.f32.partialorder %v776, inf
        %v847 = vsel %vm846, %v776, %v845
        %vm848 = vcmp.eq.f32.partialorder %v776, 0.0
        %v849 = vand.u32 %v776, 2147483648
        %v850 = vsel %vm848, %v849, %v847
        %v851 = vrsqrt.pop %v777
        %v852 = vmul.f32 %v851, %v777
        %v853 = vmul.f32 %v852, %v851
        %v854 = vmul.f32 0.5, %v853
        %v855 = vsub.f32 1.5, %v854
        %v856 = vmul.f32 %v851, %v855
        %v857 = vmul.f32 %v777, %v856
        %vm858 = vcmp.eq.f32.partialorder %v777, inf
        %v859 = vsel %vm858, %v777, %v857
        %vm860 = vcmp.eq.f32.partialorder %v777, 0.0
        %v861 = vand.u32 %v777, 2147483648
        %v862 = vsel %vm860, %v861, %v859
        %v863 = vrsqrt.pop %v778
        %v864 = vmul.f32 %v863, %v778
        %v865 = vmul.f32 %v864, %v863
        %v866 = vmul.f32 0.5, %v865
        %v867 = vsub.f32 1.5, %v866
        %v868 = vmul.f32 %v863, %v867
        %v869 = vmul.f32 %v778, %v868
        %vm870 = vcmp.eq.f32.partialorder %v778, inf
        %v871 = vsel %vm870, %v778, %v869
        %vm872 = vcmp.eq.f32.partialorder %v778, 0.0
        %v873 = vand.u32 %v778, 2147483648
        %v874 = vsel %vm872, %v873, %v871
        %v875 = vsub.f32 0.0, %v790
        %v876 = vsub.f32 0.0, %v802
        %v877 = vsub.f32 0.0, %v814
        %v878 = vsub.f32 0.0, %v826
        %v879 = vsub.f32 0.0, %v838
        %v880 = vsub.f32 0.0, %v850
        %v881 = vsub.f32 0.0, %v862
        %v882 = vsub.f32 0.0, %v874
        %v883 = vmax.f32 %v875, %v879
        %v884 = vmax.f32 %v877, %v881
        %v885 = vmax.f32 %v883, %v884
        %v886 = vrot.slane %v885, 4
        %v887 = vmax.f32 %v885, %v886
        %v888 = vrot.slane %v887, 2
        %v889 = vmax.f32 %v887, %v888
        %v890 = vrot.slane %v889, 1
        %v891 = vmax.f32 %v889, %v890
        %v892 = vmax.f32 %v876, %v880
        %v893 = vmax.f32 %v878, %v882
        %v894 = vmax.f32 %v892, %v893
        %v895 = vrot.slane %v894, 4
        %v896 = vmax.f32 %v894, %v895
        %v897 = vrot.slane %v896, 2
        %v898 = vmax.f32 %v896, %v897
        %v899 = vrot.slane %v898, 1
        %v900 = vmax.f32 %v898, %v899
        %v901 = vsub.f32 %v875, %v891
        %v902 = vsub.f32 %v876, %v900
        %v903 = vsub.f32 %v877, %v891
        %v904 = vsub.f32 %v878, %v900
        %v905 = vsub.f32 %v879, %v891
        %v906 = vsub.f32 %v880, %v900
        %v907 = vsub.f32 %v881, %v891
        %v908 = vsub.f32 %v882, %v900
        %v909 = vmul.f32 %v901, 1.442695
        %v910 = vpow.pop %v909
        %v911 = vmul.f32 %v902, 1.442695
        %v912 = vpow.pop %v911
        %v913 = vmul.f32 %v903, 1.442695
        %v914 = vpow.pop %v913
        %v915 = vmul.f32 %v904, 1.442695
        %v916 = vpow.pop %v915
        %v917 = vmul.f32 %v905, 1.442695
        %v918 = vpow.pop %v917
        %v919 = vmul.f32 %v906, 1.442695
        %v920 = vpow.pop %v919
        %v921 = vmul.f32 %v907, 1.442695
        %v922 = vpow.pop %v921
        %v923 = vmul.f32 %v908, 1.442695
        %v924 = vpow.pop %v923
        %v925 = vadd.f32 %v910, %v914
        %v926 = vadd.f32 %v925, %v918
        %v927 = vadd.f32 %v926, %v922
        %v928 = vrot.slane %v927, 4
        %v929 = vadd.f32 %v927, %v928
        %v930 = vrot.slane %v929, 2
        %v931 = vadd.f32 %v929, %v930
        %v932 = vrot.slane %v931, 1
        %v933 = vadd.f32 %v931, %v932
        %v934 = vadd.f32 %v912, %v916
        %v935 = vadd.f32 %v934, %v920
        %v936 = vadd.f32 %v935, %v924
        %v937 = vrot.slane %v936, 4
        %v938 = vadd.f32 %v936, %v937
        %v939 = vrot.slane %v938, 2
        %v940 = vadd.f32 %v938, %v939
        %v941 = vrot.slane %v940, 1
        %v942 = vadd.f32 %v940, %v941
        %v943 = vrcp.pop %v933
        %v944 = vrcp.pop %v942
        %v945 = vmul.f32 %v910, %v943
        %v946 = vmul.f32 %v912, %v944
        %v947 = vmul.f32 %v914, %v943
        %v948 = vmul.f32 %v916, %v944
        %v949 = vmul.f32 %v918, %v943
        %v950 = vmul.f32 %v920, %v944
        %v951 = vmul.f32 %v922, %v943
        %v952 = vmul.f32 %v924, %v944
        %vm953 = vcmask 261120
        %v955 = vsel %vm953, %v623, 0
        %v958 = vsel %vm953, %v624, 0
        %960 = vmatpush.msra.mxu0 0.0
        %961 = vmatpush.msra.mxu0 0.0
        %962 = vmatpush.msra.mxu0 0.0
        %963 = vmatpush.msra.mxu0 0.0
        %964 = vmatpush.msra.mxu0 0.0
        %965 = vmatpush.msra.mxu0 0.0
        %966 = vmatpush.msra.mxu0 0.0
        %967 = vmatpush.msra.mxu0 0.0
        %968 = vmatpush.msra.mxu0 0.0
        %969 = vmatpush.msra.mxu0 0.0
        %970 = vmatpush.msra.mxu0 0.0
        %971 = vmatpush.msra.mxu0 0.0
        %972 = vmatpush.msra.mxu0 %v951
        %973 = vmatpush.msra.mxu0 %v949
        %974 = vmatpush.msra.mxu0 %v947
        %975 = vmatpush.msra.mxu0 %v945
        %976 = vmatmul.f32.gmra.mxu0 %v955
        %v977 = vpop.f32.mrf.mxu0
        %v978 = vadd.f32 0.0, %v977
        %979 = vmatmul.f32.gmra.mxu0 %v958
        %v980 = vpop.f32.mrf.mxu0
        %v981 = vadd.f32 0.0, %v980
        %982 = vdwg.mxu0
        %983 = vmatpush.msra.mxu0 0.0
        %984 = vmatpush.msra.mxu0 0.0
        %985 = vmatpush.msra.mxu0 0.0
        %986 = vmatpush.msra.mxu0 0.0
        %987 = vmatpush.msra.mxu0 0.0
        %988 = vmatpush.msra.mxu0 0.0
        %989 = vmatpush.msra.mxu0 0.0
        %990 = vmatpush.msra.mxu0 0.0
        %991 = vmatpush.msra.mxu0 0.0
        %992 = vmatpush.msra.mxu0 0.0
        %993 = vmatpush.msra.mxu0 0.0
        %994 = vmatpush.msra.mxu0 0.0
        %995 = vmatpush.msra.mxu0 %v952
        %996 = vmatpush.msra.mxu0 %v950
        %997 = vmatpush.msra.mxu0 %v948
        %998 = vmatpush.msra.mxu0 %v946
        %999 = vmatmul.f32.gmra.mxu0 %v955
        %v1000 = vpop.f32.mrf.mxu0
        %v1001 = vadd.f32 0.0, %v1000
        %1002 = vmatmul.f32.gmra.mxu0 %v958
        %v1003 = vpop.f32.mrf.mxu0
        %v1004 = vadd.f32 0.0, %v1003
        %1005 = vdwg.mxu0
        %v1006 = vld [vmem:[%s466] sm:$0xff]
        %v1007 = vld [vmem:[%s466 + $0x8] sm:$0xff]
        %v1008 = vld [vmem:[%s466 + $0x10] sm:$0x3]
        %v1009 = vld [vmem:[%s466 + $0x18] sm:$0x3]
        %v1010 = vld [vmem:[%s8] sm:$0xff]
        %v1011 = vld [vmem:[%s8 + $0x8] sm:$0xff]
        %v1012 = vld [vmem:[%s8 + $0x10] sm:$0xff]
        %v1013 = vld [vmem:[%s8 + $0x18] sm:$0xff]
        %v1014 = vld [vmem:[%s8 + $0x20] sm:$0xff]
        %v1015 = vld [vmem:[%s8 + $0x28] sm:$0xff]
        %v1016 = vld [vmem:[%s8 + $0x30] sm:$0xff]
        %v1017 = vld [vmem:[%s8 + $0x38] sm:$0xff]
        %v1018 = vld [vmem:[%s9] sm:$0xff]
        %v1019 = vld [vmem:[%s9 + $0x8] sm:$0xff]
        %v1020 = vld [vmem:[%s9 + $0x10] sm:$0xff]
        %v1021 = vld [vmem:[%s9 + $0x18] sm:$0xff]
        %v1022 = vld [vmem:[%s9 + $0x20] sm:$0xff]
        %v1023 = vld [vmem:[%s9 + $0x28] sm:$0xff]
        %v1024 = vld [vmem:[%s9 + $0x30] sm:$0xff]
        %v1025 = vld [vmem:[%s9 + $0x38] sm:$0xff]
        %v1027 = vsel %vm593, %v1018, 0
        %v1030 = vsel %vm593, %v1019, 0
        %v1033 = vsel %vm593, %v1020, 0
        %v1036 = vsel %vm593, %v1021, 0
        %v1039 = vsel %vm593, %v1022, 0
        %v1042 = vsel %vm593, %v1023, 0
        %v1045 = vsel %vm593, %v1024, 0
        %v1048 = vsel %vm593, %v1025, 0
        %1050 = vmatpush.msra.mxu0 0.0
        %1051 = vmatpush.msra.mxu0 0.0
        %1052 = vmatpush.msra.mxu0 0.0
        %1053 = vmatpush.msra.mxu0 0.0
        %1054 = vmatpush.msra.mxu0 0.0
        %1055 = vmatpush.msra.mxu0 0.0
        %1056 = vmatpush.msra.mxu0 0.0
        %1057 = vmatpush.msra.mxu0 0.0
        %1058 = vmatpush.msra.mxu0 0.0
        %1059 = vmatpush.msra.mxu0 0.0
        %1060 = vmatpush.msra.mxu0 0.0
        %1061 = vmatpush.msra.mxu0 0.0
        %1062 = vmatpush.msra.mxu0 0.0
        %1063 = vmatpush.msra.mxu0 0.0
        %1064 = vmatpush.msra.mxu0 %v981
        %1065 = vmatpush.msra.mxu0 %v978
        %1066 = vmatmul.f32.gmra.mxu0 %v1027
        %v1067 = vpop.f32.mrf.mxu0
        %v1068 = vadd.f32 0.0, %v1067
        %1069 = vmatmul.f32.gmra.mxu0 %v1030
        %v1070 = vpop.f32.mrf.mxu0
        %v1071 = vadd.f32 0.0, %v1070
        %1072 = vmatmul.f32.gmra.mxu0 %v1033
        %v1073 = vpop.f32.mrf.mxu0
        %v1074 = vadd.f32 0.0, %v1073
        %1075 = vmatmul.f32.gmra.mxu0 %v1036
        %v1076 = vpop.f32.mrf.mxu0
        %v1077 = vadd.f32 0.0, %v1076
        %1078 = vmatmul.f32.gmra.mxu0 %v1039
        %v1079 = vpop.f32.mrf.mxu0
        %v1080 = vadd.f32 0.0, %v1079
        %1081 = vmatmul.f32.gmra.mxu0 %v1042
        %v1082 = vpop.f32.mrf.mxu0
        %v1083 = vadd.f32 0.0, %v1082
        %1084 = vmatmul.f32.gmra.mxu0 %v1045
        %v1085 = vpop.f32.mrf.mxu0
        %v1086 = vadd.f32 0.0, %v1085
        %1087 = vmatmul.f32.gmra.mxu0 %v1048
        %v1088 = vpop.f32.mrf.mxu0
        %v1089 = vadd.f32 0.0, %v1088
        %1090 = vdwg.mxu0
        %1091 = vmatpush.msra.mxu0 0.0
        %1092 = vmatpush.msra.mxu0 0.0
        %1093 = vmatpush.msra.mxu0 0.0
        %1094 = vmatpush.msra.mxu0 0.0
        %1095 = vmatpush.msra.mxu0 0.0
        %1096 = vmatpush.msra.mxu0 0.0
        %1097 = vmatpush.msra.mxu0 0.0
        %1098 = vmatpush.msra.mxu0 0.0
        %1099 = vmatpush.msra.mxu0 0.0
        %1100 = vmatpush.msra.mxu0 0.0
        %1101 = vmatpush.msra.mxu0 0.0
        %1102 = vmatpush.msra.mxu0 0.0
        %1103 = vmatpush.msra.mxu0 0.0
        %1104 = vmatpush.msra.mxu0 0.0
        %1105 = vmatpush.msra.mxu0 %v1004
        %1106 = vmatpush.msra.mxu0 %v1001
        %1107 = vmatmul.f32.gmra.mxu0 %v1027
        %v1108 = vpop.f32.mrf.mxu0
        %v1109 = vadd.f32 0.0, %v1108
        %1110 = vmatmul.f32.gmra.mxu0 %v1030
        %v1111 = vpop.f32.mrf.mxu0
        %v1112 = vadd.f32 0.0, %v1111
        %1113 = vmatmul.f32.gmra.mxu0 %v1033
        %v1114 = vpop.f32.mrf.mxu0
        %v1115 = vadd.f32 0.0, %v1114
        %1116 = vmatmul.f32.gmra.mxu0 %v1036
        %v1117 = vpop.f32.mrf.mxu0
        %v1118 = vadd.f32 0.0, %v1117
        %1119 = vmatmul.f32.gmra.mxu0 %v1039
        %v1120 = vpop.f32.mrf.mxu0
        %v1121 = vadd.f32 0.0, %v1120
        %1122 = vmatmul.f32.gmra.mxu0 %v1042
        %v1123 = vpop.f32.mrf.mxu0
        %v1124 = vadd.f32 0.0, %v1123
        %1125 = vmatmul.f32.gmra.mxu0 %v1045
        %v1126 = vpop.f32.mrf.mxu0
        %v1127 = vadd.f32 0.0, %v1126
        %1128 = vmatmul.f32.gmra.mxu0 %v1048
        %v1129 = vpop.f32.mrf.mxu0
        %v1130 = vadd.f32 0.0, %v1129
        %1131 = vdwg.mxu0
        %vm1132 = vcmask 80896
        %v1134 = vsel %vm1132, %v1010, 0
        %v1137 = vsel %vm1132, %v1011, 0
        %v1140 = vsel %vm1132, %v1012, 0
        %v1143 = vsel %vm1132, %v1013, 0
        %v1146 = vsel %vm1132, %v1014, 0
        %v1149 = vsel %vm1132, %v1015, 0
        %v1152 = vsel %vm1132, %v1016, 0
        %v1155 = vsel %vm1132, %v1017, 0
        %vm1157 = vcmask 1041408
        %v1159 = vsel %vm1157, %v1008, 0
        %v1162 = vsel %vm1157, %v1009, 0
        %1164 = vmatpush.msra.mxu0 0.0
        %1165 = vmatpush.msra.mxu0 0.0
        %1166 = vmatpush.msra.mxu0 0.0
        %1167 = vmatpush.msra.mxu0 0.0
        %1168 = vmatpush.msra.mxu0 0.0
        %1169 = vmatpush.msra.mxu0 0.0
        %1170 = vmatpush.msra.mxu0 0.0
        %1171 = vmatpush.msra.mxu0 0.0
        %1172 = vmatpush.msra.mxu0 0.0
        %1173 = vmatpush.msra.mxu0 0.0
        %1174 = vmatpush.msra.mxu0 0.0
        %1175 = vmatpush.msra.mxu0 0.0
        %1176 = vmatpush.msra.mxu0 0.0
        %1177 = vmatpush.msra.mxu0 0.0
        %1178 = vmatpush.msra.mxu0 %v1159
        %1179 = vmatpush.msra.mxu0 %v1006
        %1180 = vmatmul.f32.gmra.mxu0 %v1134
        %v1181 = vpop.f32.mrf.mxu0
        %v1182 = vadd.f32 %v1068, %v1181
        %1183 = vmatmul.f32.gmra.mxu0 %v1137
        %v1184 = vpop.f32.mrf.mxu0
        %v1185 = vadd.f32 %v1071, %v1184
        %1186 = vmatmul.f32.gmra.mxu0 %v1140
        %v1187 = vpop.f32.mrf.mxu0
        %v1188 = vadd.f32 %v1074, %v1187
        %1189 = vmatmul.f32.gmra.mxu0 %v1143
        %v1190 = vpop.f32.mrf.mxu0
        %v1191 = vadd.f32 %v1077, %v1190
        %1192 = vmatmul.f32.gmra.mxu0 %v1146
        %v1193 = vpop.f32.mrf.mxu0
        %v1194 = vadd.f32 %v1080, %v1193
        %1195 = vmatmul.f32.gmra.mxu0 %v1149
        %v1196 = vpop.f32.mrf.mxu0
        %v1197 = vadd.f32 %v1083, %v1196
        %1198 = vmatmul.f32.gmra.mxu0 %v1152
        %v1199 = vpop.f32.mrf.mxu0
        %v1200 = vadd.f32 %v1086, %v1199
        %1201 = vmatmul.f32.gmra.mxu0 %v1155
        %v1202 = vpop.f32.mrf.mxu0
        %v1203 = vadd.f32 %v1089, %v1202
        %1204 = vdwg.mxu0
        %1205 = vmatpush.msra.mxu0 0.0
        %1206 = vmatpush.msra.mxu0 0.0
        %1207 = vmatpush.msra.mxu0 0.0
        %1208 = vmatpush.msra.mxu0 0.0
        %1209 = vmatpush.msra.mxu0 0.0
        %1210 = vmatpush.msra.mxu0 0.0
        %1211 = vmatpush.msra.mxu0 0.0
        %1212 = vmatpush.msra.mxu0 0.0
        %1213 = vmatpush.msra.mxu0 0.0
        %1214 = vmatpush.msra.mxu0 0.0
        %1215 = vmatpush.msra.mxu0 0.0
        %1216 = vmatpush.msra.mxu0 0.0
        %1217 = vmatpush.msra.mxu0 0.0
        %1218 = vmatpush.msra.mxu0 0.0
        %1219 = vmatpush.msra.mxu0 %v1162
        %1220 = vmatpush.msra.mxu0 %v1007
        %1221 = vmatmul.f32.gmra.mxu0 %v1134
        %v1222 = vpop.f32.mrf.mxu0
        %v1223 = vadd.f32 %v1109, %v1222
        %1224 = vmatmul.f32.gmra.mxu0 %v1137
        %v1225 = vpop.f32.mrf.mxu0
        %v1226 = vadd.f32 %v1112, %v1225
        %1227 = vmatmul.f32.gmra.mxu0 %v1140
        %v1228 = vpop.f32.mrf.mxu0
        %v1229 = vadd.f32 %v1115, %v1228
        %1230 = vmatmul.f32.gmra.mxu0 %v1143
        %v1231 = vpop.f32.mrf.mxu0
        %v1232 = vadd.f32 %v1118, %v1231
        %1233 = vmatmul.f32.gmra.mxu0 %v1146
        %v1234 = vpop.f32.mrf.mxu0
        %v1235 = vadd.f32 %v1121, %v1234
        %1236 = vmatmul.f32.gmra.mxu0 %v1149
        %v1237 = vpop.f32.mrf.mxu0
        %v1238 = vadd.f32 %v1124, %v1237
        %1239 = vmatmul.f32.gmra.mxu0 %v1152
        %v1240 = vpop.f32.mrf.mxu0
        %v1241 = vadd.f32 %v1127, %v1240
        %1242 = vmatmul.f32.gmra.mxu0 %v1155
        %v1243 = vpop.f32.mrf.mxu0
        %v1244 = vadd.f32 %v1130, %v1243
        %1245 = vdwg.mxu0
        %v1246 = vld [vmem:[%s10] sm:$0xff]
        %v1247 = vld [vmem:[%s10 + $0x8] sm:$0xff]
        %v1248 = vld [vmem:[%s10 + $0x10] sm:$0xff]
        %v1249 = vld [vmem:[%s10 + $0x18] sm:$0xff]
        %v1250 = vld [vmem:[%s10 + $0x20] sm:$0xff]
        %v1251 = vld [vmem:[%s10 + $0x28] sm:$0xff]
        %v1252 = vld [vmem:[%s10 + $0x30] sm:$0xff]
        %v1253 = vld [vmem:[%s10 + $0x38] sm:$0xff]
        %1255 = vset.pattern.permute.xlu0 0
        %1256 = vperm.xlu0 %1255, %v1246
        %v1257 = vpop.permute.xlu0 %1256
        %1260 = vset.pattern.permute.xlu0 0
        %1261 = vperm.xlu0 %1260, %v1247
        %v1262 = vpop.permute.xlu0 %1261
        %1265 = vset.pattern.permute.xlu0 0
        %1266 = vperm.xlu0 %1265, %v1248
        %v1267 = vpop.permute.xlu0 %1266
        %1270 = vset.pattern.permute.xlu0 0
        %1271 = vperm.xlu0 %1270, %v1249
        %v1272 = vpop.permute.xlu0 %1271
        %1275 = vset.pattern.permute.xlu0 0
        %1276 = vperm.xlu0 %1275, %v1250
        %v1277 = vpop.permute.xlu0 %1276
        %1280 = vset.pattern.permute.xlu0 0
        %1281 = vperm.xlu0 %1280, %v1251
        %v1282 = vpop.permute.xlu0 %1281
        %1285 = vset.pattern.permute.xlu0 0
        %1286 = vperm.xlu0 %1285, %v1252
        %v1287 = vpop.permute.xlu0 %1286
        %1290 = vset.pattern.permute.xlu0 0
        %1291 = vperm.xlu0 %1290, %v1253
        %v1292 = vpop.permute.xlu0 %1291
        %v1294 = vadd.f32 %v1182, %v1257
        %v1295 = vadd.f32 %v1223, %v1257
        %v1296 = vadd.f32 %v1185, %v1262
        %v1297 = vadd.f32 %v1226, %v1262
        %v1298 = vadd.f32 %v1188, %v1267
        %v1299 = vadd.f32 %v1229, %v1267
        %v1300 = vadd.f32 %v1191, %v1272
        %v1301 = vadd.f32 %v1232, %v1272
        %v1302 = vadd.f32 %v1194, %v1277
        %v1303 = vadd.f32 %v1235, %v1277
        %v1304 = vadd.f32 %v1197, %v1282
        %v1305 = vadd.f32 %v1238, %v1282
        %v1306 = vadd.f32 %v1200, %v1287
        %v1307 = vadd.f32 %v1241, %v1287
        %v1308 = vadd.f32 %v1203, %v1292
        %v1309 = vadd.f32 %v1244, %v1292
        %v1310 = vmax.f32 %v1294, 0.0
        %v1311 = vmax.f32 %v1295, 0.0
        %v1312 = vmax.f32 %v1296, 0.0
        %v1313 = vmax.f32 %v1297, 0.0
        %v1314 = vmax.f32 %v1298, 0.0
        %v1315 = vmax.f32 %v1299, 0.0
        %v1316 = vmax.f32 %v1300, 0.0
        %v1317 = vmax.f32 %v1301, 0.0
        %v1318 = vld [vmem:[%s11] sm:$0xff]
        %v1319 = vld [vmem:[%s11 + $0x8] sm:$0xff]
        %v1320 = vld [vmem:[%s11 + $0x10] sm:$0xff]
        %v1321 = vld [vmem:[%s11 + $0x18] sm:$0xff]
        %v1322 = vld [vmem:[%s12] sm:$0xff]
        %v1323 = vld [vmem:[%s12 + $0x8] sm:$0xff]
        %v1324 = vld [vmem:[%s12 + $0x10] sm:$0xff]
        %v1325 = vld [vmem:[%s12 + $0x18] sm:$0xff]
        %1327 = vset.pattern.permute.xlu0 0
        %1328 = vperm.xlu0 %1327, %v1322
        %v1329 = vpop.permute.xlu0 %1328
        %1332 = vset.pattern.permute.xlu0 0
        %1333 = vperm.xlu0 %1332, %v1323
        %v1334 = vpop.permute.xlu0 %1333
        %1337 = vset.pattern.permute.xlu0 0
        %1338 = vperm.xlu0 %1337, %v1324
        %v1339 = vpop.permute.xlu0 %1338
        %1342 = vset.pattern.permute.xlu0 0
        %1343 = vperm.xlu0 %1342, %v1325
        %v1344 = vpop.permute.xlu0 %1343
        %v1347 = vsel %vm953, %v1318, 0
        %v1350 = vsel %vm953, %v1319, 0
        %v1353 = vsel %vm953, %v1320, 0
        %v1356 = vsel %vm953, %v1321, 0
        %1358 = vmatpush.msra.mxu0 0.0
        %1359 = vmatpush.msra.mxu0 0.0
        %1360 = vmatpush.msra.mxu0 0.0
        %1361 = vmatpush.msra.mxu0 0.0
        %1362 = vmatpush.msra.mxu0 0.0
        %1363 = vmatpush.msra.mxu0 0.0
        %1364 = vmatpush.msra.mxu0 0.0
        %1365 = vmatpush.msra.mxu0 0.0
        %1366 = vmatpush.msra.mxu0 0.0
        %1367 = vmatpush.msra.mxu0 0.0
        %1368 = vmatpush.msra.mxu0 0.0
        %1369 = vmatpush.msra.mxu0 0.0
        %1370 = vmatpush.msra.mxu0 %v1316
        %1371 = vmatpush.msra.mxu0 %v1314
        %1372 = vmatpush.msra.mxu0 %v1312
        %1373 = vmatpush.msra.mxu0 %v1310
        %1374 = vmatmul.f32.gmra.mxu0 %v1347
        %v1375 = vpop.f32.mrf.mxu0
        %v1376 = vadd.f32 %v1329, %v1375
        %1377 = vmatmul.f32.gmra.mxu0 %v1350
        %v1378 = vpop.f32.mrf.mxu0
        %v1379 = vadd.f32 %v1334, %v1378
        %1380 = vmatmul.f32.gmra.mxu0 %v1353
        %v1381 = vpop.f32.mrf.mxu0
        %v1382 = vadd.f32 %v1339, %v1381
        %1383 = vmatmul.f32.gmra.mxu0 %v1356
        %v1384 = vpop.f32.mrf.mxu0
        %v1385 = vadd.f32 %v1344, %v1384
        %1386 = vdwg.mxu0
        %1387 = vmatpush.msra.mxu0 0.0
        %1388 = vmatpush.msra.mxu0 0.0
        %1389 = vmatpush.msra.mxu0 0.0
        %1390 = vmatpush.msra.mxu0 0.0
        %1391 = vmatpush.msra.mxu0 0.0
        %1392 = vmatpush.msra.mxu0 0.0
        %1393 = vmatpush.msra.mxu0 0.0
        %1394 = vmatpush.msra.mxu0 0.0
        %1395 = vmatpush.msra.mxu0 0.0
        %1396 = vmatpush.msra.mxu0 0.0
        %1397 = vmatpush.msra.mxu0 0.0
        %1398 = vmatpush.msra.mxu0 0.0
        %1399 = vmatpush.msra.mxu0 %v1317
        %1400 = vmatpush.msra.mxu0 %v1315
        %1401 = vmatpush.msra.mxu0 %v1313
        %1402 = vmatpush.msra.mxu0 %v1311
        %1403 = vmatmul.f32.gmra.mxu0 %v1347
        %v1404 = vpop.f32.mrf.mxu0
        %v1405 = vadd.f32 %v1329, %v1404
        %1406 = vmatmul.f32.gmra.mxu0 %v1350
        %v1407 = vpop.f32.mrf.mxu0
        %v1408 = vadd.f32 %v1334, %v1407
        %1409 = vmatmul.f32.gmra.mxu0 %v1353
        %v1410 = vpop.f32.mrf.mxu0
        %v1411 = vadd.f32 %v1339, %v1410
        %1412 = vmatmul.f32.gmra.mxu0 %v1356
        %v1413 = vpop.f32.mrf.mxu0
        %v1414 = vadd.f32 %v1344, %v1413
        %1415 = vdwg.mxu0
        %v1416 = vmax.f32 %v1376, 0.0
        %v1417 = vmax.f32 %v1405, 0.0
        %v1418 = vmax.f32 %v1379, 0.0
        %v1419 = vmax.f32 %v1408, 0.0
        %v1420 = vmax.f32 %v1382, 0.0
        %v1421 = vmax.f32 %v1411, 0.0
        %v1422 = vmax.f32 %v1385, 0.0
        %v1423 = vmax.f32 %v1414, 0.0
        %1424 = vst [vmem:[%s511] sm:$0xff] %v1416
        %1425 = vst [vmem:[%s511 + $0x8] sm:$0xff] %v1417
        %1426 = vst [vmem:[%s511 + $0x10] sm:$0xff] %v1418
        %1427 = vst [vmem:[%s511 + $0x18] sm:$0xff] %v1419
        %1428 = vst [vmem:[%s511 + $0x20] sm:$0xff] %v1420
        %1429 = vst [vmem:[%s511 + $0x28] sm:$0xff] %v1421
        %1430 = vst [vmem:[%s511 + $0x30] sm:$0xff] %v1422
        %1431 = vst [vmem:[%s511 + $0x38] sm:$0xff] %v1423
        %1432 = vst [vmem:[%s518] sm:$0xff] %v1302
        %1433 = vst [vmem:[%s518 + $0x8] sm:$0xff] %v1303
        %1434 = vst [vmem:[%s518 + $0x10] sm:$0xff] %v1304
        %1435 = vst [vmem:[%s518 + $0x18] sm:$0xff] %v1305
        %1436 = vst [vmem:[%s518 + $0x20] sm:$0xff] %v1306
        %1437 = vst [vmem:[%s518 + $0x28] sm:$0xff] %v1307
        %1438 = vst [vmem:[%s518 + $0x30] sm:$0xff] %v1308
        %1439 = vst [vmem:[%s518 + $0x38] sm:$0xff] %v1309
        %s1440 = sand.u32 %s323, 1
        %s1441 = scalar_lea.sflag [#allocation4], %s1440
        %s1442 = sand.u32 %s323, 1
        %s1443 = smul.addr %s1442, 64
        %s1444 = scalar_lea.vmem [#allocation3], %s1443
        %s1445 = sand.u32 %s349, 1
        %s1446 = scalar_lea.sflag [#allocation6], %s1445
        %s1447 = sand.u32 %s349, 1
        %s1448 = smul.addr %s1447, 64
        %s1449 = scalar_lea.vmem [#allocation5], %s1448
        // Predicated region
        $region96: #{tpu_custom_call.1} parent=90 // pred_check
          %p1450 = pneg %p333
        $region97: #{tpu_custom_call.1} parent=90 // pred_check_branch
          %1452 = sbr.rel (%p1450) target = $region99
        $region98: #{tpu_custom_call.1} parent=90 // pred_region
          %s1453 = smul.u32 2, %s32
          %1455 = vsyncadd %s1441, 0
          %s1456 = smul.addr %s1453, 8
          %s1457 = scalar_lea.hbm %s13, %s1456
          %s1458 = sshll.u32 %s1444, 4
          %s1459 = int_to_ptr.vmem [resolvable:$true] %s1458
          %s1460 = sshll.u32 %s1457, 4
          %s1461 = int_to_ptr.hbm [resolvable:$true] %s1460
          %1466 = dma.vmem_to_hbm [thread:$0]  %s1459, 1024, %s1461, %s1441, 256, 512, 16
        $region99: #{tpu_custom_call.1} parent=90 // pred_fallthru
          _
        // Predicated region
        $region100: #{tpu_custom_call.1} parent=90 // pred_check
          %p1467 = pneg %p359
        $region101: #{tpu_custom_call.1} parent=90 // pred_check_branch
          %1469 = sbr.rel (%p1467) target = $region103
        $region102: #{tpu_custom_call.1} parent=90 // pred_region
          %s1470 = smul.u32 2, %s32
          %1472 = vsyncadd %s1446, 0
          %s1473 = smul.addr %s1470, 8
          %s1474 = scalar_lea.hbm %s14, %s1473
          %s1475 = sshll.u32 %s1449, 4
          %s1476 = int_to_ptr.vmem [resolvable:$true] %s1475
          %s1477 = sshll.u32 %s1474, 4
          %s1478 = int_to_ptr.hbm [resolvable:$true] %s1477
          %1483 = dma.vmem_to_hbm [thread:$0]  %s1476, 1024, %s1478, %s1446, 256, 512, 16
        $region103: #{tpu_custom_call.1} parent=90 // pred_fallthru
          _
      $region91: #{tpu_custom_call.1} parent=5 // pred_fallthru
        _
      %p1484 = scmp.le.s32.totalorder 2, %s27
      // Predicated region
      $region104: #{tpu_custom_call.1} parent=5 // pred_check
        %p1485 = pneg %p1484
      $region105: #{tpu_custom_call.1} parent=5 // pred_check_branch
        %1487 = sbr.rel (%p1485) target = $region107
      $region106: #{tpu_custom_call.1} parent=5 // pred_region
        %s1488 = ssub.s32 %s27, 2
        // Predicated region
        $region108: #{tpu_custom_call.1} parent=106 // pred_check
          %p1489 = pneg %p339
        $region109: #{tpu_custom_call.1} parent=106 // pred_check_branch
          %1491 = sbr.rel (%p1489) target = $region111
        $region110: #{tpu_custom_call.1} parent=106 // pred_region
          %s1492 = sand.u32 %s324, 1
          %s1493 = scalar_lea.sflag [#allocation4], %s1492
          %s1494 = sand.u32 %s324, 1
          %s1495 = smul.addr %s1494, 64
          %s1496 = scalar_lea.vmem [#allocation3], %s1495
          %1498 = dma.done %s1493, 1024
        $region111: #{tpu_custom_call.1} parent=106 // pred_fallthru
          _
        // Predicated region
        $region112: #{tpu_custom_call.1} parent=106 // pred_check
          %p1499 = pneg %p365
        $region113: #{tpu_custom_call.1} parent=106 // pred_check_branch
          %1501 = sbr.rel (%p1499) target = $region115
        $region114: #{tpu_custom_call.1} parent=106 // pred_region
          %s1502 = sand.u32 %s350, 1
          %s1503 = scalar_lea.sflag [#allocation6], %s1502
          %s1504 = sand.u32 %s350, 1
          %s1505 = smul.addr %s1504, 64
          %s1506 = scalar_lea.vmem [#allocation5], %s1505
          %1508 = dma.done %s1503, 1024
        $region115: #{tpu_custom_call.1} parent=106 // pred_fallthru
          _
      $region107: #{tpu_custom_call.1} parent=5 // pred_fallthru
        _
    $region6: #{tpu_custom_call.1} parent=1 // loop_footer
      %s31 = sadd.s32 1, %s27
    $region7: #{tpu_custom_call.1} parent=1 // loop_footer_branch
      %26 = sbr.rel target = $region3
    $region8: #{tpu_custom_call.1} parent=1 // loop_exit
      _
    %1509 = vsyncpa [#allocation4], 1
    %s1510 = scalar_lea.sflag [#allocation4], 1
    %1511 = vsyncpa %s1510, 1
    %1512 = vsyncpa [#allocation6], 1
    %s1513 = scalar_lea.sflag [#allocation6], 1
    %1514 = vsyncpa %s1513, 1

</llo_original>
